<compile_context>
chip_gen: v7x
topology: tpu7x:2x2x1
jax: 0.10.0
libtpu: 0.0.40
codegen_flags: <defaults>
</compile_context>

<pallas_src>
import functools
import re

import jax
import jax.numpy as jnp
from jax import lax
from jax.experimental import pallas as pl
from jax.experimental.pallas import tpu as pltpu


# -----------------------------------------------------------------------------
# Hardware helpers
# -----------------------------------------------------------------------------
@functools.lru_cache(maxsize=1)
def _tpu_generation(default=6):
    try:
        kind = jax.devices()[0].device_kind.lower()
    except Exception:
        return default
    m = re.search(r"(\d+)", kind)
    return int(m.group(1)) if m else default


def default_pack_factor():
    # 256x256 MXU (v6e/v7x): pack 8 rows -> K=N=256.  128-wide MXU (<=v5): pack 4.
    return 4 if _tpu_generation() <= 5 else 8


def _round_up(v, m):
    return ((v + m - 1) // m) * m


# -----------------------------------------------------------------------------
# Kernel
# -----------------------------------------------------------------------------
def cnn_dqn_kernel(x_ref, w1_ref, b1_ref, w_ref, b_ref, wh_ref, bh_ref, o_ref):
    # Shapes (P = pack factor, tb = packed-row tile, each packed row = P batch rows):
    #   x_ref  (tb, 16P)        f32   packed batch rows (16 features per row block)
    #   w1_ref (16P, 32P)       bf16  block-diag conv1 (output zero-padded 16->32)
    #   b1_ref (1, 32P)         f32
    #   w_ref  (5, 32P, 32P)    bf16  block-diag conv2(pad), conv3..5, hidden
    #   b_ref  (5, 1, 32P)      f32
    #   wh_ref (32P, outputs*P) f32   block-diag head (kept f32 for Q accuracy)
    #   bh_ref (1, outputs*P)   f32
    #   o_ref  (tb, outputs*P)  f32
    h = jnp.maximum(
        jnp.dot(x_ref[...].astype(jnp.bfloat16), w1_ref[...],
                preferred_element_type=jnp.float32) + b1_ref[...], 0.0)
    for l in range(5):                       # static unroll -> 5 full-width MXU passes
        h = jnp.maximum(
            jnp.dot(h.astype(jnp.bfloat16), w_ref[l],
                    preferred_element_type=jnp.float32) + b_ref[l], 0.0)
    out = jnp.dot(h, wh_ref[...], preferred_element_type=jnp.float32) + bh_ref[...]
    o_ref[...] = out.astype(o_ref.dtype)


# -----------------------------------------------------------------------------
# Wrapper
# -----------------------------------------------------------------------------
def cnn_dqn_forward(x, packed, outputs, *, block_b=8192):
    """Fused CnnDqn forward.

    x:       (B, 4, 4) float32   (L must be 4 for the module's shapes to close)
    packed:  output of pack_params()
    outputs: number of Q-values
    block_b: batch rows per grid step (amortizes ~0.35us/step overhead)
    """
    w1_bd, b1_bd, w_stack, b_stack, wh_bd, bh_bd = packed
    B, C, L = x.shape
    assert C == 4 and L == 4, "CnnDqn requires (B, 4, 4) input"
    P = w1_bd.shape[0] // 16
    out_p = wh_bd.shape[1]
    assert out_p == outputs * P

    # Channel-major flatten (= conv1 receptive field order), then a FREE
    # row-major repack of P consecutive batch rows into the lane dimension.
    x2d = x.reshape(B, C * L)
    Bp = _round_up(B, P)
    if Bp != B:                                  # rare ragged batch: pad rows, slice after
        x2d = jnp.pad(x2d, ((0, Bp - B), (0, 0)))
    n_rows = Bp // P
    x_pk = x2d.reshape(n_rows, P * C * L)

    # Batch tile in packed rows.  At the default block_b the double-buffered
    # footprint (in + out + weights) is a few MiB: well under v5e's 16 MiB and
    # v7x's 32 MiB scoped-VMEM defaults.
    tbp = min(n_rows, max(8, block_b // P))
    # Megacore split only on 2-TensorCore chips (v7x); on 1-TC chips it would
    # just halve the tile and add a grid step for nothing.
    if _tpu_generation() >= 7 and n_rows >= 16 and pl.cdiv(n_rows, tbp) < 2:
        tbp = _round_up(pl.cdiv(n_rows, 2), 8)
    grid = (pl.cdiv(n_rows, tbp),)

    out = pl.pallas_call(
        cnn_dqn_kernel,
        out_shape=jax.ShapeDtypeStruct((n_rows, out_p), jnp.float32),
        grid_spec=pltpu.PrefetchScalarGridSpec(
            num_scalar_prefetch=0,
            grid=grid,
            in_specs=[
                pl.BlockSpec((tbp, P * C * L), lambda i: (i, 0)),
                # Weights/biases: constant block index -> resident in VMEM,
                # Pallas skips the re-DMA after the first grid step.
                pl.BlockSpec(w1_bd.shape, lambda i: (0, 0)),
                pl.BlockSpec(b1_bd.shape, lambda i: (0, 0)),
                pl.BlockSpec(w_stack.shape, lambda i: (0, 0, 0)),
                pl.BlockSpec(b_stack.shape, lambda i: (0, 0, 0)),
                pl.BlockSpec(wh_bd.shape, lambda i: (0, 0)),
                pl.BlockSpec(bh_bd.shape, lambda i: (0, 0)),
            ],
            out_specs=pl.BlockSpec((tbp, out_p), lambda i: (i, 0)),
        ),
        compiler_params=pltpu.CompilerParams(
            dimension_semantics=("parallel",)),
    )(x_pk, w1_bd, b1_bd, w_stack, b_stack, wh_bd, bh_bd)

    # Free row-major reshape back to per-row Q-values; slice only if padded.
    q = out.reshape(Bp, outputs)
    return q if Bp == B else q[:B]


# -----------------------------------------------------------------------------
# Parameters (PyTorch layout) + packing into the block-diagonal kernel layout
# -----------------------------------------------------------------------------
def init_params(key, outputs, hidden=32):
    """PyTorch-layout params with nn.Conv1d/nn.Linear default init (U(+/-1/sqrt(fan_in)))."""
    shapes = {
        "conv1": (16, 4, 4),
        "conv2": (32, 16, 1),
        "conv3": (32, 32, 1),
        "conv4": (32, 32, 1),
        "conv5": (32, 32, 1),
        "hidden": (hidden, hidden),
        "head": (outputs, hidden),
    }
    params = {}
    for name, wshape in shapes.items():
        fan_in = 1
        for d in wshape[1:]:
            fan_in *= d
        key, kw, kb = jax.random.split(key, 3)
        bound = 1.0 / float(fan_in) ** 0.5
        params[f"{name}_w"] = jax.random.uniform(
            kw, wshape, jnp.float32, minval=-bound, maxval=bound)
        params[f"{name}_b"] = jax.random.uniform(
            kb, (wshape[0],), jnp.float32, minval=-bound, maxval=bound)
    return params


def _block_diag(w, P):
    """Repeat a 2-D weight P times along the block diagonal."""
    kin, kout = w.shape
    eye = jnp.eye(P, dtype=w.dtype)
    return (eye[:, None, :, None] * w[None, :, None, :]).reshape(P * kin, P * kout)


def pack_params(p, outputs, P=8):
    """PyTorch-layout params -> block-diagonal packed kernel layout."""
    def dense(w_oik):  # conv weight (out, in, k) -> dense (in*k, out)
        o = w_oik.shape[0]
        return w_oik.reshape(o, -1).T

    # Layer 1: conv1 as a (16,16) dense layer; output zero-padded to 32 so
    # layers 2..6 share one uniform (32,32) block shape.  Exact: the padded
    # activations are relu(0 + 0) = 0 and layer-2's matching input rows are 0.
    w1_blk = jnp.pad(dense(p["conv1_w"]), ((0, 0), (0, 16)))      # (16, 32)
    b1_blk = jnp.pad(p["conv1_b"], (0, 16))                       # (32,)

    # Layers 2..6: conv2 (input rows padded 16->32), conv3..5, hidden.
    w2_blk = jnp.pad(dense(p["conv2_w"]), ((0, 16), (0, 0)))      # (32, 32)
    layer_ws = [w2_blk, dense(p["conv3_w"]), dense(p["conv4_w"]),
                dense(p["conv5_w"]), p["hidden_w"].T]
    layer_bs = [p["conv2_b"], p["conv3_b"], p["conv4_b"],
                p["conv5_b"], p["hidden_b"]]

    w1_bd = _block_diag(w1_blk, P).astype(jnp.bfloat16)                       # (16P, 32P)
    b1_bd = jnp.tile(b1_blk, P).reshape(1, 32 * P).astype(jnp.float32)
    w_stack = jnp.stack([_block_diag(w, P) for w in layer_ws]
                        ).astype(jnp.bfloat16)                                # (5, 32P, 32P)
    b_stack = jnp.stack([jnp.tile(b, P) for b in layer_bs]
                        ).reshape(5, 1, 32 * P).astype(jnp.float32)
    # Head kept in f32 (N = outputs*P lanes is cheap) to limit bf16 rounding
    # on the Q-values that drive argmax action selection.
    wh_bd = _block_diag(p["head_w"].T, P).astype(jnp.float32)                 # (32P, outputs*P)
    bh_bd = jnp.tile(p["head_b"], P).reshape(1, outputs * P).astype(jnp.float32)
    return w1_bd, b1_bd, w_stack, b_stack, wh_bd, bh_bd


# -----------------------------------------------------------------------------
# Plain-JAX reference (mirrors the PyTorch module exactly, f32 throughout)
# -----------------------------------------------------------------------------
def reference_forward(x, p):
    dn = ("NCH", "OIH", "NCH")
    h = x
    for i in (1, 2, 3, 4, 5):
        w, b = p[f"conv{i}_w"], p[f"conv{i}_b"]
        h = lax.conv_general_dilated(h, w, window_strides=(1,),
                                     padding="VALID", dimension_numbers=dn)
        h = jax.nn.relu(h + b[None, :, None])
    h = h.reshape(h.shape[0], -1)
    h = jax.nn.relu(h @ p["hidden_w"].T + p["hidden_b"])
    return h @ p["head_w"].T + p["head_b"]


if __name__ == "__main__":
    key = jax.random.PRNGKey(0)
    key, kx, kx2, kp = jax.random.split(key, 4)

    channels, length = 4, 4   # L=4 is forced by the module's shapes
    hidden, outputs = 32, 8

    params = init_params(kp, outputs, hidden)
    P = default_pack_factor()
    packed = pack_params(params, outputs, P)

    # Test 1: batch divisible by the pack factor.
    batch = 64
    x = jax.random.normal(kx, (batch, channels, length), jnp.float32)
    out = jax.block_until_ready(cnn_dqn_forward(x, packed, outputs))
    ref = reference_forward(x, params)
    assert out.shape == (batch, outputs)
    max_err = float(jnp.max(jnp.abs(out - ref)))
    # bf16 MXU operands (f32 accumulation) -> bf16-appropriate tolerance.
    assert jnp.allclose(out, ref, atol=5e-2, rtol=5e-2), f"mismatch, max_err={max_err}"

    # Test 2: ragged batch (not a multiple of P) exercises the pad/slice path.
    batch2 = 13
    x2 = jax.random.normal(kx2, (batch2, channels, length), jnp.float32)
    out2 = jax.block_until_ready(cnn_dqn_forward(x2, packed, outputs))
    ref2 = reference_forward(x2, params)
    assert out2.shape == (batch2, outputs)
    max_err2 = float(jnp.max(jnp.abs(out2 - ref2)))
    assert jnp.allclose(out2, ref2, atol=5e-2, rtol=5e-2), f"mismatch, max_err={max_err2}"

    print("KERNEL_OK")
</pallas_src>

<mosaic_0001>
module attributes {stable_mosaic.version = 11 : i64} {
  func.func @cnn_dqn_kernel(%arg0: i32, %arg1: memref<8x128xf32, #tpu.memory_space<vmem>>, %arg2: memref<128x256xbf16, #tpu.memory_space<vmem>>, %arg3: memref<1x256xf32, #tpu.memory_space<vmem>>, %arg4: memref<5x256x256xbf16, #tpu.memory_space<vmem>>, %arg5: memref<5x1x256xf32, #tpu.memory_space<vmem>>, %arg6: memref<256x64xf32, #tpu.memory_space<vmem>>, %arg7: memref<1x64xf32, #tpu.memory_space<vmem>>, %arg8: memref<8x64xf32, #tpu.memory_space<vmem>>) attributes {dimension_semantics = [#tpu.dimension_semantics<parallel>], iteration_bounds = array<i64: 1>, scalar_prefetch = 0 : i64, scratch_operands = 0 : i64, tpu.core_type = #tpu.core_type<tc>, window_params = [{transform_indices = @transform_0, window_bounds = array<i64: 8, 128>}, {pipeline_mode = #tpu.pipeline_mode<synchronous>, transform_indices = @transform_1, window_bounds = array<i64: 128, 256>}, {pipeline_mode = #tpu.pipeline_mode<synchronous>, transform_indices = @transform_2, window_bounds = array<i64: 1, 256>}, {pipeline_mode = #tpu.pipeline_mode<synchronous>, transform_indices = @transform_3, window_bounds = array<i64: 5, 256, 256>}, {pipeline_mode = #tpu.pipeline_mode<synchronous>, transform_indices = @transform_4, window_bounds = array<i64: 5, 1, 256>}, {pipeline_mode = #tpu.pipeline_mode<synchronous>, transform_indices = @transform_5, window_bounds = array<i64: 256, 64>}, {pipeline_mode = #tpu.pipeline_mode<synchronous>, transform_indices = @transform_6, window_bounds = array<i64: 1, 64>}, {transform_indices = @transform_7, window_bounds = array<i64: 8, 64>}]} {
    %c0 = arith.constant 0 : index
    %c0_0 = arith.constant 0 : index
    %0 = vector.load %arg1[%c0, %c0_0] : memref<8x128xf32, #tpu.memory_space<vmem>>, vector<8x128xf32>
    %1 = arith.truncf %0 : vector<8x128xf32> to vector<8x128xbf16>
    %c0_1 = arith.constant 0 : index
    %c0_2 = arith.constant 0 : index
    %2 = vector.load %arg2[%c0_1, %c0_2] : memref<128x256xbf16, #tpu.memory_space<vmem>>, vector<128x256xbf16>
    %cst = arith.constant dense<0.000000e+00> : vector<8x256xf32>
    %3 = tpu.matmul %1, %2, %cst {dimension_numbers = #tpu.dot_dimension_numbers<[1], [0], [0], [1], [0, 0, 1, 1], [], []>} : vector<8x128xbf16>, vector<128x256xbf16>, vector<8x256xf32> -> vector<8x256xf32>
    %c0_3 = arith.constant 0 : index
    %c0_4 = arith.constant 0 : index
    %4 = vector.load %arg3[%c0_3, %c0_4] : memref<1x256xf32, #tpu.memory_space<vmem>>, vector<1x256xf32>
    %5 = vector.broadcast %4 : vector<1x256xf32> to vector<8x256xf32>
    %6 = arith.addf %3, %5 : vector<8x256xf32>
    %cst_5 = arith.constant 0.000000e+00 : f32
    %7 = vector.broadcast %cst_5 : f32 to vector<8x256xf32>
    %8 = arith.maximumf %6, %7 : vector<8x256xf32>
    %9 = arith.truncf %8 : vector<8x256xf32> to vector<8x256xbf16>
    %c0_6 = arith.constant 0 : index
    %c0_7 = arith.constant 0 : index
    %c0_8 = arith.constant 0 : index
    %10 = vector.load %arg4[%c0_6, %c0_7, %c0_8] : memref<5x256x256xbf16, #tpu.memory_space<vmem>>, vector<1x256x256xbf16>
    %11 = vector.shape_cast %10 : vector<1x256x256xbf16> to vector<256x256xbf16>
    %cst_9 = arith.constant dense<0.000000e+00> : vector<8x256xf32>
    %12 = tpu.matmul %9, %11, %cst_9 {dimension_numbers = #tpu.dot_dimension_numbers<[1], [0], [0], [1], [0, 0, 1, 1], [], []>} : vector<8x256xbf16>, vector<256x256xbf16>, vector<8x256xf32> -> vector<8x256xf32>
    %c0_10 = arith.constant 0 : index
    %c0_11 = arith.constant 0 : index
    %c0_12 = arith.constant 0 : index
    %13 = vector.load %arg5[%c0_10, %c0_11, %c0_12] : memref<5x1x256xf32, #tpu.memory_space<vmem>>, vector<1x1x256xf32>
    %14 = vector.shape_cast %13 : vector<1x1x256xf32> to vector<1x256xf32>
    %15 = vector.broadcast %14 : vector<1x256xf32> to vector<8x256xf32>
    %16 = arith.addf %12, %15 : vector<8x256xf32>
    %cst_13 = arith.constant 0.000000e+00 : f32
    %17 = vector.broadcast %cst_13 : f32 to vector<8x256xf32>
    %18 = arith.maximumf %16, %17 : vector<8x256xf32>
    %19 = arith.truncf %18 : vector<8x256xf32> to vector<8x256xbf16>
    %c1 = arith.constant 1 : index
    %c0_14 = arith.constant 0 : index
    %c0_15 = arith.constant 0 : index
    %20 = vector.load %arg4[%c1, %c0_14, %c0_15] : memref<5x256x256xbf16, #tpu.memory_space<vmem>>, vector<1x256x256xbf16>
    %21 = vector.shape_cast %20 : vector<1x256x256xbf16> to vector<256x256xbf16>
    %cst_16 = arith.constant dense<0.000000e+00> : vector<8x256xf32>
    %22 = tpu.matmul %19, %21, %cst_16 {dimension_numbers = #tpu.dot_dimension_numbers<[1], [0], [0], [1], [0, 0, 1, 1], [], []>} : vector<8x256xbf16>, vector<256x256xbf16>, vector<8x256xf32> -> vector<8x256xf32>
    %c1_17 = arith.constant 1 : index
    %c0_18 = arith.constant 0 : index
    %c0_19 = arith.constant 0 : index
    %23 = vector.load %arg5[%c1_17, %c0_18, %c0_19] : memref<5x1x256xf32, #tpu.memory_space<vmem>>, vector<1x1x256xf32>
    %24 = vector.shape_cast %23 : vector<1x1x256xf32> to vector<1x256xf32>
    %25 = vector.broadcast %24 : vector<1x256xf32> to vector<8x256xf32>
    %26 = arith.addf %22, %25 : vector<8x256xf32>
    %cst_20 = arith.constant 0.000000e+00 : f32
    %27 = vector.broadcast %cst_20 : f32 to vector<8x256xf32>
    %28 = arith.maximumf %26, %27 : vector<8x256xf32>
    %29 = arith.truncf %28 : vector<8x256xf32> to vector<8x256xbf16>
    %c2 = arith.constant 2 : index
    %c0_21 = arith.constant 0 : index
    %c0_22 = arith.constant 0 : index
    %30 = vector.load %arg4[%c2, %c0_21, %c0_22] : memref<5x256x256xbf16, #tpu.memory_space<vmem>>, vector<1x256x256xbf16>
    %31 = vector.shape_cast %30 : vector<1x256x256xbf16> to vector<256x256xbf16>
    %cst_23 = arith.constant dense<0.000000e+00> : vector<8x256xf32>
    %32 = tpu.matmul %29, %31, %cst_23 {dimension_numbers = #tpu.dot_dimension_numbers<[1], [0], [0], [1], [0, 0, 1, 1], [], []>} : vector<8x256xbf16>, vector<256x256xbf16>, vector<8x256xf32> -> vector<8x256xf32>
    %c2_24 = arith.constant 2 : index
    %c0_25 = arith.constant 0 : index
    %c0_26 = arith.constant 0 : index
    %33 = vector.load %arg5[%c2_24, %c0_25, %c0_26] : memref<5x1x256xf32, #tpu.memory_space<vmem>>, vector<1x1x256xf32>
    %34 = vector.shape_cast %33 : vector<1x1x256xf32> to vector<1x256xf32>
    %35 = vector.broadcast %34 : vector<1x256xf32> to vector<8x256xf32>
    %36 = arith.addf %32, %35 : vector<8x256xf32>
    %cst_27 = arith.constant 0.000000e+00 : f32
    %37 = vector.broadcast %cst_27 : f32 to vector<8x256xf32>
    %38 = arith.maximumf %36, %37 : vector<8x256xf32>
    %39 = arith.truncf %38 : vector<8x256xf32> to vector<8x256xbf16>
    %c3 = arith.constant 3 : index
    %c0_28 = arith.constant 0 : index
    %c0_29 = arith.constant 0 : index
    %40 = vector.load %arg4[%c3, %c0_28, %c0_29] : memref<5x256x256xbf16, #tpu.memory_space<vmem>>, vector<1x256x256xbf16>
    %41 = vector.shape_cast %40 : vector<1x256x256xbf16> to vector<256x256xbf16>
    %cst_30 = arith.constant dense<0.000000e+00> : vector<8x256xf32>
    %42 = tpu.matmul %39, %41, %cst_30 {dimension_numbers = #tpu.dot_dimension_numbers<[1], [0], [0], [1], [0, 0, 1, 1], [], []>} : vector<8x256xbf16>, vector<256x256xbf16>, vector<8x256xf32> -> vector<8x256xf32>
    %c3_31 = arith.constant 3 : index
    %c0_32 = arith.constant 0 : index
    %c0_33 = arith.constant 0 : index
    %43 = vector.load %arg5[%c3_31, %c0_32, %c0_33] : memref<5x1x256xf32, #tpu.memory_space<vmem>>, vector<1x1x256xf32>
    %44 = vector.shape_cast %43 : vector<1x1x256xf32> to vector<1x256xf32>
    %45 = vector.broadcast %44 : vector<1x256xf32> to vector<8x256xf32>
    %46 = arith.addf %42, %45 : vector<8x256xf32>
    %cst_34 = arith.constant 0.000000e+00 : f32
    %47 = vector.broadcast %cst_34 : f32 to vector<8x256xf32>
    %48 = arith.maximumf %46, %47 : vector<8x256xf32>
    %49 = arith.truncf %48 : vector<8x256xf32> to vector<8x256xbf16>
    %c4 = arith.constant 4 : index
    %c0_35 = arith.constant 0 : index
    %c0_36 = arith.constant 0 : index
    %50 = vector.load %arg4[%c4, %c0_35, %c0_36] : memref<5x256x256xbf16, #tpu.memory_space<vmem>>, vector<1x256x256xbf16>
    %51 = vector.shape_cast %50 : vector<1x256x256xbf16> to vector<256x256xbf16>
    %cst_37 = arith.constant dense<0.000000e+00> : vector<8x256xf32>
    %52 = tpu.matmul %49, %51, %cst_37 {dimension_numbers = #tpu.dot_dimension_numbers<[1], [0], [0], [1], [0, 0, 1, 1], [], []>} : vector<8x256xbf16>, vector<256x256xbf16>, vector<8x256xf32> -> vector<8x256xf32>
    %c4_38 = arith.constant 4 : index
    %c0_39 = arith.constant 0 : index
    %c0_40 = arith.constant 0 : index
    %53 = vector.load %arg5[%c4_38, %c0_39, %c0_40] : memref<5x1x256xf32, #tpu.memory_space<vmem>>, vector<1x1x256xf32>
    %54 = vector.shape_cast %53 : vector<1x1x256xf32> to vector<1x256xf32>
    %55 = vector.broadcast %54 : vector<1x256xf32> to vector<8x256xf32>
    %56 = arith.addf %52, %55 : vector<8x256xf32>
    %cst_41 = arith.constant 0.000000e+00 : f32
    %57 = vector.broadcast %cst_41 : f32 to vector<8x256xf32>
    %58 = arith.maximumf %56, %57 : vector<8x256xf32>
    %c0_42 = arith.constant 0 : index
    %c0_43 = arith.constant 0 : index
    %59 = vector.load %arg6[%c0_42, %c0_43] : memref<256x64xf32, #tpu.memory_space<vmem>>, vector<256x64xf32>
    %cst_44 = arith.constant dense<0.000000e+00> : vector<8x64xf32>
    %60 = tpu.matmul %58, %59, %cst_44 {dimension_numbers = #tpu.dot_dimension_numbers<[1], [0], [0], [1], [0, 0, 1, 1], [], []>} : vector<8x256xf32>, vector<256x64xf32>, vector<8x64xf32> -> vector<8x64xf32>
    %c0_45 = arith.constant 0 : index
    %c0_46 = arith.constant 0 : index
    %61 = vector.load %arg7[%c0_45, %c0_46] : memref<1x64xf32, #tpu.memory_space<vmem>>, vector<1x64xf32>
    %62 = vector.broadcast %61 : vector<1x64xf32> to vector<8x64xf32>
    %63 = arith.addf %60, %62 : vector<8x64xf32>
    %c0_47 = arith.constant 0 : index
    %c0_48 = arith.constant 0 : index
    %64 = vector.load %arg8[%c0_47, %c0_48] : memref<8x64xf32, #tpu.memory_space<vmem>>, vector<8x64xf32>
    tpu.vector_store %arg8[%c0_47, %c0_48], %63 {strides = array<i32>} : memref<8x64xf32, #tpu.memory_space<vmem>>, vector<8x64xf32>,
    return
  }
  func.func @transform_0(%arg0: i32) -> (i32, i32) {
    %c0_i32 = arith.constant 0 : i32
    %c0_i32_0 = arith.constant 0 : i32
    return %arg0, %c0_i32 : i32, i32
  }
  func.func @transform_1(%arg0: i32) -> (i32, i32) {
    %c0_i32 = arith.constant 0 : i32
    %c0_i32_0 = arith.constant 0 : i32
    %c0_i32_1 = arith.constant 0 : i32
    return %c0_i32, %c0_i32_0 : i32, i32
  }
  func.func @transform_2(%arg0: i32) -> (i32, i32) {
    %c0_i32 = arith.constant 0 : i32
    %c0_i32_0 = arith.constant 0 : i32
    %c0_i32_1 = arith.constant 0 : i32
    return %c0_i32, %c0_i32_0 : i32, i32
  }
  func.func @transform_3(%arg0: i32) -> (i32, i32, i32) {
    %c0_i32 = arith.constant 0 : i32
    %c0_i32_0 = arith.constant 0 : i32
    %c0_i32_1 = arith.constant 0 : i32
    %c0_i32_2 = arith.constant 0 : i32
    return %c0_i32, %c0_i32_0, %c0_i32_1 : i32, i32, i32
  }
  func.func @transform_4(%arg0: i32) -> (i32, i32, i32) {
    %c0_i32 = arith.constant 0 : i32
    %c0_i32_0 = arith.constant 0 : i32
    %c0_i32_1 = arith.constant 0 : i32
    %c0_i32_2 = arith.constant 0 : i32
    return %c0_i32, %c0_i32_0, %c0_i32_1 : i32, i32, i32
  }
  func.func @transform_5(%arg0: i32) -> (i32, i32) {
    %c0_i32 = arith.constant 0 : i32
    %c0_i32_0 = arith.constant 0 : i32
    %c0_i32_1 = arith.constant 0 : i32
    return %c0_i32, %c0_i32_0 : i32, i32
  }
  func.func @transform_6(%arg0: i32) -> (i32, i32) {
    %c0_i32 = arith.constant 0 : i32
    %c0_i32_0 = arith.constant 0 : i32
    %c0_i32_1 = arith.constant 0 : i32
    return %c0_i32, %c0_i32_0 : i32, i32
  }
  func.func @transform_7(%arg0: i32) -> (i32, i32) {
    %c0_i32 = arith.constant 0 : i32
    %c0_i32_0 = arith.constant 0 : i32
    return %arg0, %c0_i32 : i32, i32
  }
}

</mosaic_0001>

<llo_original>
// kernel: tpu_custom_call.1
$region0: #{tpu_custom_call.1}
  #allocation0 [shape = 'u32[]', space=smem, size = 0x4, offset = 0x4, fixed_abs, tag = 'smem constant byte address 0x4 - core index']
  #allocation1 [shape = 'u32[144,128]{1,0:T(1,128)}', space=vmem, size = 0x12000, scoped, tag = 'internal scratch']
  %s0 = inlined_call_operand.vmem [shape: f32[8,128], index: 0, kind: input, shape index: {}]
  %s1 = inlined_call_operand.vmem [shape: bf16[128,256], index: 1, kind: input, shape index: {}]
  %s2 = inlined_call_operand.vmem [shape: f32[1,256], index: 2, kind: input, shape index: {}]
  %s3 = inlined_call_operand.hbm [shape: bf16[5,256,256], index: 3, kind: input, shape index: {}]
  %s4 = inlined_call_operand.vmem [shape: f32[5,1,256], index: 4, kind: input, shape index: {}]
  %s5 = inlined_call_operand.vmem [shape: f32[256,64], index: 5, kind: input, shape index: {}]
  %s6 = inlined_call_operand.vmem [shape: f32[1,64], index: 6, kind: input, shape index: {}]
  %s7 = inlined_call_operand.hbm [shape: f32[8,64], index: 7, kind: output, shape index: {}]
  %s8 = sld [smem:[#allocation0]]
  $region42: #{tpu_custom_call.1} parent=0
    _
  %s10 = ssub.s32 1, %s8
  %s11 = scalar_select 0, %s10, %s8
  $region1: #{tpu_custom_call.1} parent=0
    #allocation2 [shape = 'u8[655360]{0}', space=vmem, size = 0xa0000, scoped, tag = 'input window, operand 3, single buffered']
    #allocation3 [shape = 's32[1]{0}', space=sflag, size = 0x4, scoped, tag = 'scoped memory for tpu_custom_call.1']
    #allocation4 [shape = 's32[1]{0}', space=sflag, size = 0x4, scoped, tag = 'scoped memory for tpu_custom_call.1']
    #allocation5 [shape = 'u8[4096]{0}', space=vmem, size = 0x1000, scoped, tag = 'output window, operand 0, single buffered']
    %12 = vsyncpa [#allocation3], 0
    %13 = vsyncpa [#allocation4], 0
    // Predicated region
    $region2: #{tpu_custom_call.1} parent=1 // pred_check
      _
    $region3: #{tpu_custom_call.1} parent=1 // pred_check_branch
      %15 = sbr.rel (0) target = $region5
    $region4: #{tpu_custom_call.1} parent=1 // pred_region
      _
    $region5: #{tpu_custom_call.1} parent=1 // pred_fallthru
      _
    // Predicated region
    $region6: #{tpu_custom_call.1} parent=1 // pred_check
      _
    $region7: #{tpu_custom_call.1} parent=1 // pred_check_branch
      %17 = sbr.rel (0) target = $region9
    $region8: #{tpu_custom_call.1} parent=1 // pred_region
      _
    $region9: #{tpu_custom_call.1} parent=1 // pred_fallthru
      _
    // Predicated region
    $region10: #{tpu_custom_call.1} parent=1 // pred_check
      _
    $region11: #{tpu_custom_call.1} parent=1 // pred_check_branch
      %19 = sbr.rel (0) target = $region13
    $region12: #{tpu_custom_call.1} parent=1 // pred_region
      _
    $region13: #{tpu_custom_call.1} parent=1 // pred_fallthru
      _
    // Predicated region
    $region14: #{tpu_custom_call.1} parent=1 // pred_check
      _
    $region15: #{tpu_custom_call.1} parent=1 // pred_check_branch
      %21 = sbr.rel (0) target = $region17
    $region16: #{tpu_custom_call.1} parent=1 // pred_region
      %s23 = ssub.s32 20480, 20480
      %24 = vsyncadd [#allocation3], %s23
      %s25 = sshll.u32 [#allocation2], 4
      %s26 = int_to_ptr.vmem [resolvable:$true] %s25
      %31 = dma.hbm_to_vmem [thread:$0]  %s3, 20480, %s26, [#allocation3], 128, 128, 8
    $region17: #{tpu_custom_call.1} parent=1 // pred_fallthru
      _
    // Predicated region
    $region18: #{tpu_custom_call.1} parent=1 // pred_check
      _
    $region19: #{tpu_custom_call.1} parent=1 // pred_check_branch
      %33 = sbr.rel (0) target = $region21
    $region20: #{tpu_custom_call.1} parent=1 // pred_region
      _
    $region21: #{tpu_custom_call.1} parent=1 // pred_fallthru
      _
    // Predicated region
    $region22: #{tpu_custom_call.1} parent=1 // pred_check
      _
    $region23: #{tpu_custom_call.1} parent=1 // pred_check_branch
      %35 = sbr.rel (0) target = $region25
    $region24: #{tpu_custom_call.1} parent=1 // pred_region
      _
    $region25: #{tpu_custom_call.1} parent=1 // pred_fallthru
      _
    // Predicated region
    $region26: #{tpu_custom_call.1} parent=1 // pred_check
      _
    $region27: #{tpu_custom_call.1} parent=1 // pred_check_branch
      %37 = sbr.rel (0) target = $region29
    $region28: #{tpu_custom_call.1} parent=1 // pred_region
      _
    $region29: #{tpu_custom_call.1} parent=1 // pred_fallthru
      _
    // Predicated region
    $region30: #{tpu_custom_call.1} parent=1 // pred_check
      _
    $region31: #{tpu_custom_call.1} parent=1 // pred_check_branch
      %39 = sbr.rel (0) target = $region33
    $region32: #{tpu_custom_call.1} parent=1 // pred_region
      %40 = dma.done [#allocation3], 20480
    $region33: #{tpu_custom_call.1} parent=1 // pred_fallthru
      _
    %v42 = vld [vmem:[%s0] sm:$0xff]
    %v43 = vpack.c.bf16 %v42, %v42
    %v44 = vld [vmem:[%s1] sm:$0xff]
    %v45 = vld [vmem:[%s1 + $0x8] sm:$0xff]
    %v46 = vld [vmem:[%s1 + $0x10] sm:$0xff]
    %v47 = vld [vmem:[%s1 + $0x18] sm:$0xff]
    %v48 = vld [vmem:[%s1 + $0x20] sm:$0xff]
    %v49 = vld [vmem:[%s1 + $0x28] sm:$0xff]
    %v50 = vld [vmem:[%s1 + $0x30] sm:$0xff]
    %v51 = vld [vmem:[%s1 + $0x38] sm:$0xff]
    %v52 = vld [vmem:[%s1 + $0x40] sm:$0xff]
    %v53 = vld [vmem:[%s1 + $0x48] sm:$0xff]
    %v54 = vld [vmem:[%s1 + $0x50] sm:$0xff]
    %v55 = vld [vmem:[%s1 + $0x58] sm:$0xff]
    %v56 = vld [vmem:[%s1 + $0x60] sm:$0xff]
    %v57 = vld [vmem:[%s1 + $0x68] sm:$0xff]
    %v58 = vld [vmem:[%s1 + $0x70] sm:$0xff]
    %v59 = vld [vmem:[%s1 + $0x78] sm:$0xff]
    %v60 = vld [vmem:[%s2] sm:$0x3]
    %v62 = vlaneseq
    %v63 = vshrl.u32 %v62, 7
    %v64 = vsub.s32 0, %v63
    %v65 = vrot.slane %v60, %v64
    %v66 = vlaneseq
    %v67 = vshrl.u32 %v66, 7
    %v68 = vsub.s32 1, %v67
    %v69 = vrot.slane %v60, %v68
    %v88 = vunpack.c.l.b16 %v44
    %v89 = vunpack.c.h.b16 %v44
    %v90 = vunpack.c.l.b16 %v45
    %v91 = vunpack.c.h.b16 %v45
    %v92 = vunpack.c.l.b16 %v46
    %v93 = vunpack.c.h.b16 %v46
    %v94 = vunpack.c.l.b16 %v47
    %v95 = vunpack.c.h.b16 %v47
    %v96 = vunpack.c.l.b16 %v48
    %v97 = vunpack.c.h.b16 %v48
    %v98 = vunpack.c.l.b16 %v49
    %v99 = vunpack.c.h.b16 %v49
    %v100 = vunpack.c.l.b16 %v50
    %v101 = vunpack.c.h.b16 %v50
    %v102 = vunpack.c.l.b16 %v51
    %v103 = vunpack.c.h.b16 %v51
    %v104 = vunpack.c.l.b16 %v52
    %v105 = vunpack.c.h.b16 %v52
    %v106 = vunpack.c.l.b16 %v53
    %v107 = vunpack.c.h.b16 %v53
    %v108 = vunpack.c.l.b16 %v54
    %v109 = vunpack.c.h.b16 %v54
    %v110 = vunpack.c.l.b16 %v55
    %v111 = vunpack.c.h.b16 %v55
    %v112 = vunpack.c.l.b16 %v56
    %v113 = vunpack.c.h.b16 %v56
    %v114 = vunpack.c.l.b16 %v57
    %v115 = vunpack.c.h.b16 %v57
    %v116 = vunpack.c.l.b16 %v58
    %v117 = vunpack.c.h.b16 %v58
    %v118 = vunpack.c.l.b16 %v59
    %v119 = vunpack.c.h.b16 %v59
    %v120 = vpack.c.b16 %v90, %v88
    %v121 = vpack.c.b16 %v91, %v89
    %v122 = vpack.c.b16 %v94, %v92
    %v123 = vpack.c.b16 %v95, %v93
    %v124 = vpack.c.b16 %v98, %v96
    %v125 = vpack.c.b16 %v99, %v97
    %v126 = vpack.c.b16 %v102, %v100
    %v127 = vpack.c.b16 %v103, %v101
    %v128 = vpack.c.b16 %v106, %v104
    %v129 = vpack.c.b16 %v107, %v105
    %v130 = vpack.c.b16 %v110, %v108
    %v131 = vpack.c.b16 %v111, %v109
    %v132 = vpack.c.b16 %v114, %v112
    %v133 = vpack.c.b16 %v115, %v113
    %v134 = vpack.c.b16 %v118, %v116
    %v135 = vpack.c.b16 %v119, %v117
    %152 = vmatprep.subr.bf16.mxu0 %v121
    %153 = vmatpush1.bf16.msra.mxu0 %v120
    %154 = vmatprep.subr.bf16.mxu0 %v123
    %155 = vmatpush1.bf16.msra.mxu0 %v122
    %156 = vmatprep.subr.bf16.mxu0 %v125
    %157 = vmatpush1.bf16.msra.mxu0 %v124
    %158 = vmatprep.subr.bf16.mxu0 %v127
    %159 = vmatpush1.bf16.msra.mxu0 %v126
    %160 = vmatprep.subr.bf16.mxu0 %v129
    %161 = vmatpush1.bf16.msra.mxu0 %v128
    %162 = vmatprep.subr.bf16.mxu0 %v131
    %163 = vmatpush1.bf16.msra.mxu0 %v130
    %164 = vmatprep.subr.bf16.mxu0 %v133
    %165 = vmatpush1.bf16.msra.mxu0 %v132
    %166 = vmatprep.subr.bf16.mxu0 %v135
    %167 = vmatpush1.bf16.msra.mxu0 %v134
    %168 = vmatprep.subr.bf16.mxu0 0
    %169 = vmatpush1.bf16.msra.mxu0 0
    %170 = vmatprep.subr.bf16.mxu0 0
    %171 = vmatpush1.bf16.msra.mxu0 0
    %172 = vmatprep.subr.bf16.mxu0 0
    %173 = vmatpush1.bf16.msra.mxu0 0
    %174 = vmatprep.subr.bf16.mxu0 0
    %175 = vmatpush1.bf16.msra.mxu0 0
    %176 = vmatprep.subr.bf16.mxu0 0
    %177 = vmatpush1.bf16.msra.mxu0 0
    %178 = vmatprep.subr.bf16.mxu0 0
    %179 = vmatpush1.bf16.msra.mxu0 0
    %180 = vmatprep.subr.bf16.mxu0 0
    %181 = vmatpush1.bf16.msra.mxu0 0
    %182 = vmatprep.subr.bf16.mxu0 0
    %183 = vmatpush1.bf16.msra.mxu0 0
    %184 = vmatprep.mubr.bf16.mxu0 0
    %185 = vmatmul.mubr.bf16.gmra.mrb[0].mxu0 %v43
    %v186 = vpop.f32.mrb[0].mxu0
    %v187 = vadd.f32 %v65, %v186
    %v188 = vpop.f32.mrb[0].mxu0
    %v189 = vadd.f32 %v69, %v188
    %v190 = vpop.f32.mrb[0].mxu0
    %v191 = vpop.f32.mrb[0].mxu0
    %192 = vdwg.mxu0
    %v193 = vmax.f32 %v187, 0.0
    %v194 = vmax.f32 %v189, 0.0
    %v195 = vpack.c.bf16 %v193, %v193
    %v196 = vpack.c.bf16 %v194, %v194
    %v197 = vld [vmem:[#allocation2] sm:$0xff]
    %v198 = vld [vmem:[#allocation2 + $0x8] sm:$0xff]
    %v199 = vld [vmem:[#allocation2 + $0x10] sm:$0xff]
    %v200 = vld [vmem:[#allocation2 + $0x18] sm:$0xff]
    %v201 = vld [vmem:[#allocation2 + $0x20] sm:$0xff]
    %v202 = vld [vmem:[#allocation2 + $0x28] sm:$0xff]
    %v203 = vld [vmem:[#allocation2 + $0x30] sm:$0xff]
    %v204 = vld [vmem:[#allocation2 + $0x38] sm:$0xff]
    %v205 = vld [vmem:[#allocation2 + $0x40] sm:$0xff]
    %v206 = vld [vmem:[#allocation2 + $0x48] sm:$0xff]
    %v207 = vld [vmem:[#allocation2 + $0x50] sm:$0xff]
    %v208 = vld [vmem:[#allocation2 + $0x58] sm:$0xff]
    %v209 = vld [vmem:[#allocation2 + $0x60] sm:$0xff]
    %v210 = vld [vmem:[#allocation2 + $0x68] sm:$0xff]
    %v211 = vld [vmem:[#allocation2 + $0x70] sm:$0xff]
    %v212 = vld [vmem:[#allocation2 + $0x78] sm:$0xff]
    %v213 = vld [vmem:[#allocation2 + $0x80] sm:$0xff]
    %v214 = vld [vmem:[#allocation2 + $0x88] sm:$0xff]
    %v215 = vld [vmem:[#allocation2 + $0x90] sm:$0xff]
    %v216 = vld [vmem:[#allocation2 + $0x98] sm:$0xff]
    %v217 = vld [vmem:[#allocation2 + $0xa0] sm:$0xff]
    %v218 = vld [vmem:[#allocation2 + $0xa8] sm:$0xff]
    %v219 = vld [vmem:[#allocation2 + $0xb0] sm:$0xff]
    %v220 = vld [vmem:[#allocation2 + $0xb8] sm:$0xff]
    %v221 = vld [vmem:[#allocation2 + $0xc0] sm:$0xff]
    %v222 = vld [vmem:[#allocation2 + $0xc8] sm:$0xff]
    %v223 = vld [vmem:[#allocation2 + $0xd0] sm:$0xff]
    %v224 = vld [vmem:[#allocation2 + $0xd8] sm:$0xff]
    %v225 = vld [vmem:[#allocation2 + $0xe0] sm:$0xff]
    %v226 = vld [vmem:[#allocation2 + $0xe8] sm:$0xff]
    %v227 = vld [vmem:[#allocation2 + $0xf0] sm:$0xff]
    %v228 = vld [vmem:[#allocation2 + $0xf8] sm:$0xff]
    %v229 = vld [vmem:[%s4] sm:$0x3]
    %v231 = vlaneseq
    %v232 = vshrl.u32 %v231, 7
    %v233 = vsub.s32 0, %v232
    %v234 = vrot.slane %v229, %v233
    %v235 = vlaneseq
    %v236 = vshrl.u32 %v235, 7
    %v237 = vsub.s32 1, %v236
    %v238 = vrot.slane %v229, %v237
    %v273 = vunpack.c.l.b16 %v197
    %v274 = vunpack.c.h.b16 %v197
    %v275 = vunpack.c.l.b16 %v198
    %v276 = vunpack.c.h.b16 %v198
    %v277 = vunpack.c.l.b16 %v199
    %v278 = vunpack.c.h.b16 %v199
    %v279 = vunpack.c.l.b16 %v200
    %v280 = vunpack.c.h.b16 %v200
    %v281 = vunpack.c.l.b16 %v201
    %v282 = vunpack.c.h.b16 %v201
    %v283 = vunpack.c.l.b16 %v202
    %v284 = vunpack.c.h.b16 %v202
    %v285 = vunpack.c.l.b16 %v203
    %v286 = vunpack.c.h.b16 %v203
    %v287 = vunpack.c.l.b16 %v204
    %v288 = vunpack.c.h.b16 %v204
    %v289 = vunpack.c.l.b16 %v205
    %v290 = vunpack.c.h.b16 %v205
    %v291 = vunpack.c.l.b16 %v206
    %v292 = vunpack.c.h.b16 %v206
    %v293 = vunpack.c.l.b16 %v207
    %v294 = vunpack.c.h.b16 %v207
    %v295 = vunpack.c.l.b16 %v208
    %v296 = vunpack.c.h.b16 %v208
    %v297 = vunpack.c.l.b16 %v209
    %v298 = vunpack.c.h.b16 %v209
    %v299 = vunpack.c.l.b16 %v210
    %v300 = vunpack.c.h.b16 %v210
    %v301 = vunpack.c.l.b16 %v211
    %v302 = vunpack.c.h.b16 %v211
    %v303 = vunpack.c.l.b16 %v212
    %v304 = vunpack.c.h.b16 %v212
    %v305 = vunpack.c.l.b16 %v213
    %v306 = vunpack.c.h.b16 %v213
    %v307 = vunpack.c.l.b16 %v214
    %v308 = vunpack.c.h.b16 %v214
    %v309 = vunpack.c.l.b16 %v215
    %v310 = vunpack.c.h.b16 %v215
    %v311 = vunpack.c.l.b16 %v216
    %v312 = vunpack.c.h.b16 %v216
    %v313 = vunpack.c.l.b16 %v217
    %v314 = vunpack.c.h.b16 %v217
    %v315 = vunpack.c.l.b16 %v218
    %v316 = vunpack.c.h.b16 %v218
    %v317 = vunpack.c.l.b16 %v219
    %v318 = vunpack.c.h.b16 %v219
    %v319 = vunpack.c.l.b16 %v220
    %v320 = vunpack.c.h.b16 %v220
    %v321 = vunpack.c.l.b16 %v221
    %v322 = vunpack.c.h.b16 %v221
    %v323 = vunpack.c.l.b16 %v222
    %v324 = vunpack.c.h.b16 %v222
    %v325 = vunpack.c.l.b16 %v223
    %v326 = vunpack.c.h.b16 %v223
    %v327 = vunpack.c.l.b16 %v224
    %v328 = vunpack.c.h.b16 %v224
    %v329 = vunpack.c.l.b16 %v225
    %v330 = vunpack.c.h.b16 %v225
    %v331 = vunpack.c.l.b16 %v226
    %v332 = vunpack.c.h.b16 %v226
    %v333 = vunpack.c.l.b16 %v227
    %v334 = vunpack.c.h.b16 %v227
    %v335 = vunpack.c.l.b16 %v228
    %v336 = vunpack.c.h.b16 %v228
    %v337 = vpack.c.b16 %v275, %v273
    %v338 = vpack.c.b16 %v276, %v274
    %v339 = vpack.c.b16 %v279, %v277
    %v340 = vpack.c.b16 %v280, %v278
    %v341 = vpack.c.b16 %v283, %v281
    %v342 = vpack.c.b16 %v284, %v282
    %v343 = vpack.c.b16 %v287, %v285
    %v344 = vpack.c.b16 %v288, %v286
    %v345 = vpack.c.b16 %v291, %v289
    %v346 = vpack.c.b16 %v292, %v290
    %v347 = vpack.c.b16 %v295, %v293
    %v348 = vpack.c.b16 %v296, %v294
    %v349 = vpack.c.b16 %v299, %v297
    %v350 = vpack.c.b16 %v300, %v298
    %v351 = vpack.c.b16 %v303, %v301
    %v352 = vpack.c.b16 %v304, %v302
    %v353 = vpack.c.b16 %v307, %v305
    %v354 = vpack.c.b16 %v308, %v306
    %v355 = vpack.c.b16 %v311, %v309
    %v356 = vpack.c.b16 %v312, %v310
    %v357 = vpack.c.b16 %v315, %v313
    %v358 = vpack.c.b16 %v316, %v314
    %v359 = vpack.c.b16 %v319, %v317
    %v360 = vpack.c.b16 %v320, %v318
    %v361 = vpack.c.b16 %v323, %v321
    %v362 = vpack.c.b16 %v324, %v322
    %v363 = vpack.c.b16 %v327, %v325
    %v364 = vpack.c.b16 %v328, %v326
    %v365 = vpack.c.b16 %v331, %v329
    %v366 = vpack.c.b16 %v332, %v330
    %v367 = vpack.c.b16 %v335, %v333
    %v368 = vpack.c.b16 %v336, %v334
    %401 = vmatprep.subr.bf16.mxu0 %v338
    %402 = vmatpush1.bf16.msra.mxu0 %v337
    %403 = vmatprep.subr.bf16.mxu0 %v340
    %404 = vmatpush1.bf16.msra.mxu0 %v339
    %405 = vmatprep.subr.bf16.mxu0 %v342
    %406 = vmatpush1.bf16.msra.mxu0 %v341
    %407 = vmatprep.subr.bf16.mxu0 %v344
    %408 = vmatpush1.bf16.msra.mxu0 %v343
    %409 = vmatprep.subr.bf16.mxu0 %v346
    %410 = vmatpush1.bf16.msra.mxu0 %v345
    %411 = vmatprep.subr.bf16.mxu0 %v348
    %412 = vmatpush1.bf16.msra.mxu0 %v347
    %413 = vmatprep.subr.bf16.mxu0 %v350
    %414 = vmatpush1.bf16.msra.mxu0 %v349
    %415 = vmatprep.subr.bf16.mxu0 %v352
    %416 = vmatpush1.bf16.msra.mxu0 %v351
    %417 = vmatprep.subr.bf16.mxu0 %v354
    %418 = vmatpush1.bf16.msra.mxu0 %v353
    %419 = vmatprep.subr.bf16.mxu0 %v356
    %420 = vmatpush1.bf16.msra.mxu0 %v355
    %421 = vmatprep.subr.bf16.mxu0 %v358
    %422 = vmatpush1.bf16.msra.mxu0 %v357
    %423 = vmatprep.subr.bf16.mxu0 %v360
    %424 = vmatpush1.bf16.msra.mxu0 %v359
    %425 = vmatprep.subr.bf16.mxu0 %v362
    %426 = vmatpush1.bf16.msra.mxu0 %v361
    %427 = vmatprep.subr.bf16.mxu0 %v364
    %428 = vmatpush1.bf16.msra.mxu0 %v363
    %429 = vmatprep.subr.bf16.mxu0 %v366
    %430 = vmatpush1.bf16.msra.mxu0 %v365
    %431 = vmatprep.subr.bf16.mxu0 %v368
    %432 = vmatpush1.bf16.msra.mxu0 %v367
    %433 = vmatprep.mubr.bf16.mxu0 %v196
    %434 = vmatmul.mubr.bf16.gmra.mrb[0].mxu0 %v195
    %v435 = vpop.f32.mrb[0].mxu0
    %v436 = vadd.f32 %v234, %v435
    %v437 = vpop.f32.mrb[0].mxu0
    %v438 = vadd.f32 %v238, %v437
    %v439 = vpop.f32.mrb[0].mxu0
    %v440 = vpop.f32.mrb[0].mxu0
    %441 = vdwg.mxu0
    %v442 = vmax.f32 %v436, 0.0
    %v443 = vmax.f32 %v438, 0.0
    %v444 = vpack.c.bf16 %v442, %v442
    %v445 = vpack.c.bf16 %v443, %v443
    %s446 = scalar_lea.vmem [#allocation2], 256
    %v447 = vld [vmem:[%s446] sm:$0xff]
    %v448 = vld [vmem:[%s446 + $0x8] sm:$0xff]
    %v449 = vld [vmem:[%s446 + $0x10] sm:$0xff]
    %v450 = vld [vmem:[%s446 + $0x18] sm:$0xff]
    %v451 = vld [vmem:[%s446 + $0x20] sm:$0xff]
    %v452 = vld [vmem:[%s446 + $0x28] sm:$0xff]
    %v453 = vld [vmem:[%s446 + $0x30] sm:$0xff]
    %v454 = vld [vmem:[%s446 + $0x38] sm:$0xff]
    %v455 = vld [vmem:[%s446 + $0x40] sm:$0xff]
    %v456 = vld [vmem:[%s446 + $0x48] sm:$0xff]
    %v457 = vld [vmem:[%s446 + $0x50] sm:$0xff]
    %v458 = vld [vmem:[%s446 + $0x58] sm:$0xff]
    %v459 = vld [vmem:[%s446 + $0x60] sm:$0xff]
    %v460 = vld [vmem:[%s446 + $0x68] sm:$0xff]
    %v461 = vld [vmem:[%s446 + $0x70] sm:$0xff]
    %v462 = vld [vmem:[%s446 + $0x78] sm:$0xff]
    %v463 = vld [vmem:[%s446 + $0x80] sm:$0xff]
    %v464 = vld [vmem:[%s446 + $0x88] sm:$0xff]
    %v465 = vld [vmem:[%s446 + $0x90] sm:$0xff]
    %v466 = vld [vmem:[%s446 + $0x98] sm:$0xff]
    %v467 = vld [vmem:[%s446 + $0xa0] sm:$0xff]
    %v468 = vld [vmem:[%s446 + $0xa8] sm:$0xff]
    %v469 = vld [vmem:[%s446 + $0xb0] sm:$0xff]
    %v470 = vld [vmem:[%s446 + $0xb8] sm:$0xff]
    %v471 = vld [vmem:[%s446 + $0xc0] sm:$0xff]
    %v472 = vld [vmem:[%s446 + $0xc8] sm:$0xff]
    %v473 = vld [vmem:[%s446 + $0xd0] sm:$0xff]
    %v474 = vld [vmem:[%s446 + $0xd8] sm:$0xff]
    %v475 = vld [vmem:[%s446 + $0xe0] sm:$0xff]
    %v476 = vld [vmem:[%s446 + $0xe8] sm:$0xff]
    %v477 = vld [vmem:[%s446 + $0xf0] sm:$0xff]
    %v478 = vld [vmem:[%s446 + $0xf8] sm:$0xff]
    %s479 = scalar_lea.vmem %s4, 2
    %v480 = vld [vmem:[%s479] sm:$0x3]
    %v482 = vlaneseq
    %v483 = vshrl.u32 %v482, 7
    %v484 = vsub.s32 0, %v483
    %v485 = vrot.slane %v480, %v484
    %v486 = vlaneseq
    %v487 = vshrl.u32 %v486, 7
    %v488 = vsub.s32 1, %v487
    %v489 = vrot.slane %v480, %v488
    %v524 = vunpack.c.l.b16 %v447
    %v525 = vunpack.c.h.b16 %v447
    %v526 = vunpack.c.l.b16 %v448
    %v527 = vunpack.c.h.b16 %v448
    %v528 = vunpack.c.l.b16 %v449
    %v529 = vunpack.c.h.b16 %v449
    %v530 = vunpack.c.l.b16 %v450
    %v531 = vunpack.c.h.b16 %v450
    %v532 = vunpack.c.l.b16 %v451
    %v533 = vunpack.c.h.b16 %v451
    %v534 = vunpack.c.l.b16 %v452
    %v535 = vunpack.c.h.b16 %v452
    %v536 = vunpack.c.l.b16 %v453
    %v537 = vunpack.c.h.b16 %v453
    %v538 = vunpack.c.l.b16 %v454
    %v539 = vunpack.c.h.b16 %v454
    %v540 = vunpack.c.l.b16 %v455
    %v541 = vunpack.c.h.b16 %v455
    %v542 = vunpack.c.l.b16 %v456
    %v543 = vunpack.c.h.b16 %v456
    %v544 = vunpack.c.l.b16 %v457
    %v545 = vunpack.c.h.b16 %v457
    %v546 = vunpack.c.l.b16 %v458
    %v547 = vunpack.c.h.b16 %v458
    %v548 = vunpack.c.l.b16 %v459
    %v549 = vunpack.c.h.b16 %v459
    %v550 = vunpack.c.l.b16 %v460
    %v551 = vunpack.c.h.b16 %v460
    %v552 = vunpack.c.l.b16 %v461
    %v553 = vunpack.c.h.b16 %v461
    %v554 = vunpack.c.l.b16 %v462
    %v555 = vunpack.c.h.b16 %v462
    %v556 = vunpack.c.l.b16 %v463
    %v557 = vunpack.c.h.b16 %v463
    %v558 = vunpack.c.l.b16 %v464
    %v559 = vunpack.c.h.b16 %v464
    %v560 = vunpack.c.l.b16 %v465
    %v561 = vunpack.c.h.b16 %v465
    %v562 = vunpack.c.l.b16 %v466
    %v563 = vunpack.c.h.b16 %v466
    %v564 = vunpack.c.l.b16 %v467
    %v565 = vunpack.c.h.b16 %v467
    %v566 = vunpack.c.l.b16 %v468
    %v567 = vunpack.c.h.b16 %v468
    %v568 = vunpack.c.l.b16 %v469
    %v569 = vunpack.c.h.b16 %v469
    %v570 = vunpack.c.l.b16 %v470
    %v571 = vunpack.c.h.b16 %v470
    %v572 = vunpack.c.l.b16 %v471
    %v573 = vunpack.c.h.b16 %v471
    %v574 = vunpack.c.l.b16 %v472
    %v575 = vunpack.c.h.b16 %v472
    %v576 = vunpack.c.l.b16 %v473
    %v577 = vunpack.c.h.b16 %v473
    %v578 = vunpack.c.l.b16 %v474
    %v579 = vunpack.c.h.b16 %v474
    %v580 = vunpack.c.l.b16 %v475
    %v581 = vunpack.c.h.b16 %v475
    %v582 = vunpack.c.l.b16 %v476
    %v583 = vunpack.c.h.b16 %v476
    %v584 = vunpack.c.l.b16 %v477
    %v585 = vunpack.c.h.b16 %v477
    %v586 = vunpack.c.l.b16 %v478
    %v587 = vunpack.c.h.b16 %v478
    %v588 = vpack.c.b16 %v526, %v524
    %v589 = vpack.c.b16 %v527, %v525
    %v590 = vpack.c.b16 %v530, %v528
    %v591 = vpack.c.b16 %v531, %v529
    %v592 = vpack.c.b16 %v534, %v532
    %v593 = vpack.c.b16 %v535, %v533
    %v594 = vpack.c.b16 %v538, %v536
    %v595 = vpack.c.b16 %v539, %v537
    %v596 = vpack.c.b16 %v542, %v540
    %v597 = vpack.c.b16 %v543, %v541
    %v598 = vpack.c.b16 %v546, %v544
    %v599 = vpack.c.b16 %v547, %v545
    %v600 = vpack.c.b16 %v550, %v548
    %v601 = vpack.c.b16 %v551, %v549
    %v602 = vpack.c.b16 %v554, %v552
    %v603 = vpack.c.b16 %v555, %v553
    %v604 = vpack.c.b16 %v558, %v556
    %v605 = vpack.c.b16 %v559, %v557
    %v606 = vpack.c.b16 %v562, %v560
    %v607 = vpack.c.b16 %v563, %v561
    %v608 = vpack.c.b16 %v566, %v564
    %v609 = vpack.c.b16 %v567, %v565
    %v610 = vpack.c.b16 %v570, %v568
    %v611 = vpack.c.b16 %v571, %v569
    %v612 = vpack.c.b16 %v574, %v572
    %v613 = vpack.c.b16 %v575, %v573
    %v614 = vpack.c.b16 %v578, %v576
    %v615 = vpack.c.b16 %v579, %v577
    %v616 = vpack.c.b16 %v582, %v580
    %v617 = vpack.c.b16 %v583, %v581
    %v618 = vpack.c.b16 %v586, %v584
    %v619 = vpack.c.b16 %v587, %v585
    %652 = vmatprep.subr.bf16.mxu0 %v589
    %653 = vmatpush1.bf16.msra.mxu0 %v588
    %654 = vmatprep.subr.bf16.mxu0 %v591
    %655 = vmatpush1.bf16.msra.mxu0 %v590
    %656 = vmatprep.subr.bf16.mxu0 %v593
    %657 = vmatpush1.bf16.msra.mxu0 %v592
    %658 = vmatprep.subr.bf16.mxu0 %v595
    %659 = vmatpush1.bf16.msra.mxu0 %v594
    %660 = vmatprep.subr.bf16.mxu0 %v597
    %661 = vmatpush1.bf16.msra.mxu0 %v596
    %662 = vmatprep.subr.bf16.mxu0 %v599
    %663 = vmatpush1.bf16.msra.mxu0 %v598
    %664 = vmatprep.subr.bf16.mxu0 %v601
    %665 = vmatpush1.bf16.msra.mxu0 %v600
    %666 = vmatprep.subr.bf16.mxu0 %v603
    %667 = vmatpush1.bf16.msra.mxu0 %v602
    %668 = vmatprep.subr.bf16.mxu0 %v605
    %669 = vmatpush1.bf16.msra.mxu0 %v604
    %670 = vmatprep.subr.bf16.mxu0 %v607
    %671 = vmatpush1.bf16.msra.mxu0 %v606
    %672 = vmatprep.subr.bf16.mxu0 %v609
    %673 = vmatpush1.bf16.msra.mxu0 %v608
    %674 = vmatprep.subr.bf16.mxu0 %v611
    %675 = vmatpush1.bf16.msra.mxu0 %v610
    %676 = vmatprep.subr.bf16.mxu0 %v613
    %677 = vmatpush1.bf16.msra.mxu0 %v612
    %678 = vmatprep.subr.bf16.mxu0 %v615
    %679 = vmatpush1.bf16.msra.mxu0 %v614
    %680 = vmatprep.subr.bf16.mxu0 %v617
    %681 = vmatpush1.bf16.msra.mxu0 %v616
    %682 = vmatprep.subr.bf16.mxu0 %v619
    %683 = vmatpush1.bf16.msra.mxu0 %v618
    %684 = vmatprep.mubr.bf16.mxu0 %v445
    %685 = vmatmul.mubr.bf16.gmra.mrb[0].mxu0 %v444
    %v686 = vpop.f32.mrb[0].mxu0
    %v687 = vadd.f32 %v485, %v686
    %v688 = vpop.f32.mrb[0].mxu0
    %v689 = vadd.f32 %v489, %v688
    %v690 = vpop.f32.mrb[0].mxu0
    %v691 = vpop.f32.mrb[0].mxu0
    %692 = vdwg.mxu0
    %v693 = vmax.f32 %v687, 0.0
    %v694 = vmax.f32 %v689, 0.0
    %v695 = vpack.c.bf16 %v693, %v693
    %v696 = vpack.c.bf16 %v694, %v694
    %s697 = scalar_lea.vmem [#allocation2], 512
    %v698 = vld [vmem:[%s697] sm:$0xff]
    %v699 = vld [vmem:[%s697 + $0x8] sm:$0xff]
    %v700 = vld [vmem:[%s697 + $0x10] sm:$0xff]
    %v701 = vld [vmem:[%s697 + $0x18] sm:$0xff]
    %v702 = vld [vmem:[%s697 + $0x20] sm:$0xff]
    %v703 = vld [vmem:[%s697 + $0x28] sm:$0xff]
    %v704 = vld [vmem:[%s697 + $0x30] sm:$0xff]
    %v705 = vld [vmem:[%s697 + $0x38] sm:$0xff]
    %v706 = vld [vmem:[%s697 + $0x40] sm:$0xff]
    %v707 = vld [vmem:[%s697 + $0x48] sm:$0xff]
    %v708 = vld [vmem:[%s697 + $0x50] sm:$0xff]
    %v709 = vld [vmem:[%s697 + $0x58] sm:$0xff]
    %v710 = vld [vmem:[%s697 + $0x60] sm:$0xff]
    %v711 = vld [vmem:[%s697 + $0x68] sm:$0xff]
    %v712 = vld [vmem:[%s697 + $0x70] sm:$0xff]
    %v713 = vld [vmem:[%s697 + $0x78] sm:$0xff]
    %v714 = vld [vmem:[%s697 + $0x80] sm:$0xff]
    %v715 = vld [vmem:[%s697 + $0x88] sm:$0xff]
    %v716 = vld [vmem:[%s697 + $0x90] sm:$0xff]
    %v717 = vld [vmem:[%s697 + $0x98] sm:$0xff]
    %v718 = vld [vmem:[%s697 + $0xa0] sm:$0xff]
    %v719 = vld [vmem:[%s697 + $0xa8] sm:$0xff]
    %v720 = vld [vmem:[%s697 + $0xb0] sm:$0xff]
    %v721 = vld [vmem:[%s697 + $0xb8] sm:$0xff]
    %v722 = vld [vmem:[%s697 + $0xc0] sm:$0xff]
    %v723 = vld [vmem:[%s697 + $0xc8] sm:$0xff]
    %v724 = vld [vmem:[%s697 + $0xd0] sm:$0xff]
    %v725 = vld [vmem:[%s697 + $0xd8] sm:$0xff]
    %v726 = vld [vmem:[%s697 + $0xe0] sm:$0xff]
    %v727 = vld [vmem:[%s697 + $0xe8] sm:$0xff]
    %v728 = vld [vmem:[%s697 + $0xf0] sm:$0xff]
    %v729 = vld [vmem:[%s697 + $0xf8] sm:$0xff]
    %s730 = scalar_lea.vmem %s4, 4
    %v731 = vld [vmem:[%s730] sm:$0x3]
    %v733 = vlaneseq
    %v734 = vshrl.u32 %v733, 7
    %v735 = vsub.s32 0, %v734
    %v736 = vrot.slane %v731, %v735
    %v737 = vlaneseq
    %v738 = vshrl.u32 %v737, 7
    %v739 = vsub.s32 1, %v738
    %v740 = vrot.slane %v731, %v739
    %v775 = vunpack.c.l.b16 %v698
    %v776 = vunpack.c.h.b16 %v698
    %v777 = vunpack.c.l.b16 %v699
    %v778 = vunpack.c.h.b16 %v699
    %v779 = vunpack.c.l.b16 %v700
    %v780 = vunpack.c.h.b16 %v700
    %v781 = vunpack.c.l.b16 %v701
    %v782 = vunpack.c.h.b16 %v701
    %v783 = vunpack.c.l.b16 %v702
    %v784 = vunpack.c.h.b16 %v702
    %v785 = vunpack.c.l.b16 %v703
    %v786 = vunpack.c.h.b16 %v703
    %v787 = vunpack.c.l.b16 %v704
    %v788 = vunpack.c.h.b16 %v704
    %v789 = vunpack.c.l.b16 %v705
    %v790 = vunpack.c.h.b16 %v705
    %v791 = vunpack.c.l.b16 %v706
    %v792 = vunpack.c.h.b16 %v706
    %v793 = vunpack.c.l.b16 %v707
    %v794 = vunpack.c.h.b16 %v707
    %v795 = vunpack.c.l.b16 %v708
    %v796 = vunpack.c.h.b16 %v708
    %v797 = vunpack.c.l.b16 %v709
    %v798 = vunpack.c.h.b16 %v709
    %v799 = vunpack.c.l.b16 %v710
    %v800 = vunpack.c.h.b16 %v710
    %v801 = vunpack.c.l.b16 %v711
    %v802 = vunpack.c.h.b16 %v711
    %v803 = vunpack.c.l.b16 %v712
    %v804 = vunpack.c.h.b16 %v712
    %v805 = vunpack.c.l.b16 %v713
    %v806 = vunpack.c.h.b16 %v713
    %v807 = vunpack.c.l.b16 %v714
    %v808 = vunpack.c.h.b16 %v714
    %v809 = vunpack.c.l.b16 %v715
    %v810 = vunpack.c.h.b16 %v715
    %v811 = vunpack.c.l.b16 %v716
    %v812 = vunpack.c.h.b16 %v716
    %v813 = vunpack.c.l.b16 %v717
    %v814 = vunpack.c.h.b16 %v717
    %v815 = vunpack.c.l.b16 %v718
    %v816 = vunpack.c.h.b16 %v718
    %v817 = vunpack.c.l.b16 %v719
    %v818 = vunpack.c.h.b16 %v719
    %v819 = vunpack.c.l.b16 %v720
    %v820 = vunpack.c.h.b16 %v720
    %v821 = vunpack.c.l.b16 %v721
    %v822 = vunpack.c.h.b16 %v721
    %v823 = vunpack.c.l.b16 %v722
    %v824 = vunpack.c.h.b16 %v722
    %v825 = vunpack.c.l.b16 %v723
    %v826 = vunpack.c.h.b16 %v723
    %v827 = vunpack.c.l.b16 %v724
    %v828 = vunpack.c.h.b16 %v724
    %v829 = vunpack.c.l.b16 %v725
    %v830 = vunpack.c.h.b16 %v725
    %v831 = vunpack.c.l.b16 %v726
    %v832 = vunpack.c.h.b16 %v726
    %v833 = vunpack.c.l.b16 %v727
    %v834 = vunpack.c.h.b16 %v727
    %v835 = vunpack.c.l.b16 %v728
    %v836 = vunpack.c.h.b16 %v728
    %v837 = vunpack.c.l.b16 %v729
    %v838 = vunpack.c.h.b16 %v729
    %v839 = vpack.c.b16 %v777, %v775
    %v840 = vpack.c.b16 %v778, %v776
    %v841 = vpack.c.b16 %v781, %v779
    %v842 = vpack.c.b16 %v782, %v780
    %v843 = vpack.c.b16 %v785, %v783
    %v844 = vpack.c.b16 %v786, %v784
    %v845 = vpack.c.b16 %v789, %v787
    %v846 = vpack.c.b16 %v790, %v788
    %v847 = vpack.c.b16 %v793, %v791
    %v848 = vpack.c.b16 %v794, %v792
    %v849 = vpack.c.b16 %v797, %v795
    %v850 = vpack.c.b16 %v798, %v796
    %v851 = vpack.c.b16 %v801, %v799
    %v852 = vpack.c.b16 %v802, %v800
    %v853 = vpack.c.b16 %v805, %v803
    %v854 = vpack.c.b16 %v806, %v804
    %v855 = vpack.c.b16 %v809, %v807
    %v856 = vpack.c.b16 %v810, %v808
    %v857 = vpack.c.b16 %v813, %v811
    %v858 = vpack.c.b16 %v814, %v812
    %v859 = vpack.c.b16 %v817, %v815
    %v860 = vpack.c.b16 %v818, %v816
    %v861 = vpack.c.b16 %v821, %v819
    %v862 = vpack.c.b16 %v822, %v820
    %v863 = vpack.c.b16 %v825, %v823
    %v864 = vpack.c.b16 %v826, %v824
    %v865 = vpack.c.b16 %v829, %v827
    %v866 = vpack.c.b16 %v830, %v828
    %v867 = vpack.c.b16 %v833, %v831
    %v868 = vpack.c.b16 %v834, %v832
    %v869 = vpack.c.b16 %v837, %v835
    %v870 = vpack.c.b16 %v838, %v836
    %903 = vmatprep.subr.bf16.mxu0 %v840
    %904 = vmatpush1.bf16.msra.mxu0 %v839
    %905 = vmatprep.subr.bf16.mxu0 %v842
    %906 = vmatpush1.bf16.msra.mxu0 %v841
    %907 = vmatprep.subr.bf16.mxu0 %v844
    %908 = vmatpush1.bf16.msra.mxu0 %v843
    %909 = vmatprep.subr.bf16.mxu0 %v846
    %910 = vmatpush1.bf16.msra.mxu0 %v845
    %911 = vmatprep.subr.bf16.mxu0 %v848
    %912 = vmatpush1.bf16.msra.mxu0 %v847
    %913 = vmatprep.subr.bf16.mxu0 %v850
    %914 = vmatpush1.bf16.msra.mxu0 %v849
    %915 = vmatprep.subr.bf16.mxu0 %v852
    %916 = vmatpush1.bf16.msra.mxu0 %v851
    %917 = vmatprep.subr.bf16.mxu0 %v854
    %918 = vmatpush1.bf16.msra.mxu0 %v853
    %919 = vmatprep.subr.bf16.mxu0 %v856
    %920 = vmatpush1.bf16.msra.mxu0 %v855
    %921 = vmatprep.subr.bf16.mxu0 %v858
    %922 = vmatpush1.bf16.msra.mxu0 %v857
    %923 = vmatprep.subr.bf16.mxu0 %v860
    %924 = vmatpush1.bf16.msra.mxu0 %v859
    %925 = vmatprep.subr.bf16.mxu0 %v862
    %926 = vmatpush1.bf16.msra.mxu0 %v861
    %927 = vmatprep.subr.bf16.mxu0 %v864
    %928 = vmatpush1.bf16.msra.mxu0 %v863
    %929 = vmatprep.subr.bf16.mxu0 %v866
    %930 = vmatpush1.bf16.msra.mxu0 %v865
    %931 = vmatprep.subr.bf16.mxu0 %v868
    %932 = vmatpush1.bf16.msra.mxu0 %v867
    %933 = vmatprep.subr.bf16.mxu0 %v870
    %934 = vmatpush1.bf16.msra.mxu0 %v869
    %935 = vmatprep.mubr.bf16.mxu0 %v696
    %936 = vmatmul.mubr.bf16.gmra.mrb[0].mxu0 %v695
    %v937 = vpop.f32.mrb[0].mxu0
    %v938 = vadd.f32 %v736, %v937
    %v939 = vpop.f32.mrb[0].mxu0
    %v940 = vadd.f32 %v740, %v939
    %v941 = vpop.f32.mrb[0].mxu0
    %v942 = vpop.f32.mrb[0].mxu0
    %943 = vdwg.mxu0
    %v944 = vmax.f32 %v938, 0.0
    %v945 = vmax.f32 %v940, 0.0
    %v946 = vpack.c.bf16 %v944, %v944
    %v947 = vpack.c.bf16 %v945, %v945
    %s948 = scalar_lea.vmem [#allocation2], 768
    %v949 = vld [vmem:[%s948] sm:$0xff]
    %v950 = vld [vmem:[%s948 + $0x8] sm:$0xff]
    %v951 = vld [vmem:[%s948 + $0x10] sm:$0xff]
    %v952 = vld [vmem:[%s948 + $0x18] sm:$0xff]
    %v953 = vld [vmem:[%s948 + $0x20] sm:$0xff]
    %v954 = vld [vmem:[%s948 + $0x28] sm:$0xff]
    %v955 = vld [vmem:[%s948 + $0x30] sm:$0xff]
    %v956 = vld [vmem:[%s948 + $0x38] sm:$0xff]
    %v957 = vld [vmem:[%s948 + $0x40] sm:$0xff]
    %v958 = vld [vmem:[%s948 + $0x48] sm:$0xff]
    %v959 = vld [vmem:[%s948 + $0x50] sm:$0xff]
    %v960 = vld [vmem:[%s948 + $0x58] sm:$0xff]
    %v961 = vld [vmem:[%s948 + $0x60] sm:$0xff]
    %v962 = vld [vmem:[%s948 + $0x68] sm:$0xff]
    %v963 = vld [vmem:[%s948 + $0x70] sm:$0xff]
    %v964 = vld [vmem:[%s948 + $0x78] sm:$0xff]
    %v965 = vld [vmem:[%s948 + $0x80] sm:$0xff]
    %v966 = vld [vmem:[%s948 + $0x88] sm:$0xff]
    %v967 = vld [vmem:[%s948 + $0x90] sm:$0xff]
    %v968 = vld [vmem:[%s948 + $0x98] sm:$0xff]
    %v969 = vld [vmem:[%s948 + $0xa0] sm:$0xff]
    %v970 = vld [vmem:[%s948 + $0xa8] sm:$0xff]
    %v971 = vld [vmem:[%s948 + $0xb0] sm:$0xff]
    %v972 = vld [vmem:[%s948 + $0xb8] sm:$0xff]
    %v973 = vld [vmem:[%s948 + $0xc0] sm:$0xff]
    %v974 = vld [vmem:[%s948 + $0xc8] sm:$0xff]
    %v975 = vld [vmem:[%s948 + $0xd0] sm:$0xff]
    %v976 = vld [vmem:[%s948 + $0xd8] sm:$0xff]
    %v977 = vld [vmem:[%s948 + $0xe0] sm:$0xff]
    %v978 = vld [vmem:[%s948 + $0xe8] sm:$0xff]
    %v979 = vld [vmem:[%s948 + $0xf0] sm:$0xff]
    %v980 = vld [vmem:[%s948 + $0xf8] sm:$0xff]
    %s981 = scalar_lea.vmem %s4, 6
    %v982 = vld [vmem:[%s981] sm:$0x3]
    %v984 = vlaneseq
    %v985 = vshrl.u32 %v984, 7
    %v986 = vsub.s32 0, %v985
    %v987 = vrot.slane %v982, %v986
    %v988 = vlaneseq
    %v989 = vshrl.u32 %v988, 7
    %v990 = vsub.s32 1, %v989
    %v991 = vrot.slane %v982, %v990
    %v1026 = vunpack.c.l.b16 %v949
    %v1027 = vunpack.c.h.b16 %v949
    %v1028 = vunpack.c.l.b16 %v950
    %v1029 = vunpack.c.h.b16 %v950
    %v1030 = vunpack.c.l.b16 %v951
    %v1031 = vunpack.c.h.b16 %v951
    %v1032 = vunpack.c.l.b16 %v952
    %v1033 = vunpack.c.h.b16 %v952
    %v1034 = vunpack.c.l.b16 %v953
    %v1035 = vunpack.c.h.b16 %v953
    %v1036 = vunpack.c.l.b16 %v954
    %v1037 = vunpack.c.h.b16 %v954
    %v1038 = vunpack.c.l.b16 %v955
    %v1039 = vunpack.c.h.b16 %v955
    %v1040 = vunpack.c.l.b16 %v956
    %v1041 = vunpack.c.h.b16 %v956
    %v1042 = vunpack.c.l.b16 %v957
    %v1043 = vunpack.c.h.b16 %v957
    %v1044 = vunpack.c.l.b16 %v958
    %v1045 = vunpack.c.h.b16 %v958
    %v1046 = vunpack.c.l.b16 %v959
    %v1047 = vunpack.c.h.b16 %v959
    %v1048 = vunpack.c.l.b16 %v960
    %v1049 = vunpack.c.h.b16 %v960
    %v1050 = vunpack.c.l.b16 %v961
    %v1051 = vunpack.c.h.b16 %v961
    %v1052 = vunpack.c.l.b16 %v962
    %v1053 = vunpack.c.h.b16 %v962
    %v1054 = vunpack.c.l.b16 %v963
    %v1055 = vunpack.c.h.b16 %v963
    %v1056 = vunpack.c.l.b16 %v964
    %v1057 = vunpack.c.h.b16 %v964
    %v1058 = vunpack.c.l.b16 %v965
    %v1059 = vunpack.c.h.b16 %v965
    %v1060 = vunpack.c.l.b16 %v966
    %v1061 = vunpack.c.h.b16 %v966
    %v1062 = vunpack.c.l.b16 %v967
    %v1063 = vunpack.c.h.b16 %v967
    %v1064 = vunpack.c.l.b16 %v968
    %v1065 = vunpack.c.h.b16 %v968
    %v1066 = vunpack.c.l.b16 %v969
    %v1067 = vunpack.c.h.b16 %v969
    %v1068 = vunpack.c.l.b16 %v970
    %v1069 = vunpack.c.h.b16 %v970
    %v1070 = vunpack.c.l.b16 %v971
    %v1071 = vunpack.c.h.b16 %v971
    %v1072 = vunpack.c.l.b16 %v972
    %v1073 = vunpack.c.h.b16 %v972
    %v1074 = vunpack.c.l.b16 %v973
    %v1075 = vunpack.c.h.b16 %v973
    %v1076 = vunpack.c.l.b16 %v974
    %v1077 = vunpack.c.h.b16 %v974
    %v1078 = vunpack.c.l.b16 %v975
    %v1079 = vunpack.c.h.b16 %v975
    %v1080 = vunpack.c.l.b16 %v976
    %v1081 = vunpack.c.h.b16 %v976
    %v1082 = vunpack.c.l.b16 %v977
    %v1083 = vunpack.c.h.b16 %v977
    %v1084 = vunpack.c.l.b16 %v978
    %v1085 = vunpack.c.h.b16 %v978
    %v1086 = vunpack.c.l.b16 %v979
    %v1087 = vunpack.c.h.b16 %v979
    %v1088 = vunpack.c.l.b16 %v980
    %v1089 = vunpack.c.h.b16 %v980
    %v1090 = vpack.c.b16 %v1028, %v1026
    %v1091 = vpack.c.b16 %v1029, %v1027
    %v1092 = vpack.c.b16 %v1032, %v1030
    %v1093 = vpack.c.b16 %v1033, %v1031
    %v1094 = vpack.c.b16 %v1036, %v1034
    %v1095 = vpack.c.b16 %v1037, %v1035
    %v1096 = vpack.c.b16 %v1040, %v1038
    %v1097 = vpack.c.b16 %v1041, %v1039
    %v1098 = vpack.c.b16 %v1044, %v1042
    %v1099 = vpack.c.b16 %v1045, %v1043
    %v1100 = vpack.c.b16 %v1048, %v1046
    %v1101 = vpack.c.b16 %v1049, %v1047
    %v1102 = vpack.c.b16 %v1052, %v1050
    %v1103 = vpack.c.b16 %v1053, %v1051
    %v1104 = vpack.c.b16 %v1056, %v1054
    %v1105 = vpack.c.b16 %v1057, %v1055
    %v1106 = vpack.c.b16 %v1060, %v1058
    %v1107 = vpack.c.b16 %v1061, %v1059
    %v1108 = vpack.c.b16 %v1064, %v1062
    %v1109 = vpack.c.b16 %v1065, %v1063
    %v1110 = vpack.c.b16 %v1068, %v1066
    %v1111 = vpack.c.b16 %v1069, %v1067
    %v1112 = vpack.c.b16 %v1072, %v1070
    %v1113 = vpack.c.b16 %v1073, %v1071
    %v1114 = vpack.c.b16 %v1076, %v1074
    %v1115 = vpack.c.b16 %v1077, %v1075
    %v1116 = vpack.c.b16 %v1080, %v1078
    %v1117 = vpack.c.b16 %v1081, %v1079
    %v1118 = vpack.c.b16 %v1084, %v1082
    %v1119 = vpack.c.b16 %v1085, %v1083
    %v1120 = vpack.c.b16 %v1088, %v1086
    %v1121 = vpack.c.b16 %v1089, %v1087
    %1154 = vmatprep.subr.bf16.mxu0 %v1091
    %1155 = vmatpush1.bf16.msra.mxu0 %v1090
    %1156 = vmatprep.subr.bf16.mxu0 %v1093
    %1157 = vmatpush1.bf16.msra.mxu0 %v1092
    %1158 = vmatprep.subr.bf16.mxu0 %v1095
    %1159 = vmatpush1.bf16.msra.mxu0 %v1094
    %1160 = vmatprep.subr.bf16.mxu0 %v1097
    %1161 = vmatpush1.bf16.msra.mxu0 %v1096
    %1162 = vmatprep.subr.bf16.mxu0 %v1099
    %1163 = vmatpush1.bf16.msra.mxu0 %v1098
    %1164 = vmatprep.subr.bf16.mxu0 %v1101
    %1165 = vmatpush1.bf16.msra.mxu0 %v1100
    %1166 = vmatprep.subr.bf16.mxu0 %v1103
    %1167 = vmatpush1.bf16.msra.mxu0 %v1102
    %1168 = vmatprep.subr.bf16.mxu0 %v1105
    %1169 = vmatpush1.bf16.msra.mxu0 %v1104
    %1170 = vmatprep.subr.bf16.mxu0 %v1107
    %1171 = vmatpush1.bf16.msra.mxu0 %v1106
    %1172 = vmatprep.subr.bf16.mxu0 %v1109
    %1173 = vmatpush1.bf16.msra.mxu0 %v1108
    %1174 = vmatprep.subr.bf16.mxu0 %v1111
    %1175 = vmatpush1.bf16.msra.mxu0 %v1110
    %1176 = vmatprep.subr.bf16.mxu0 %v1113
    %1177 = vmatpush1.bf16.msra.mxu0 %v1112
    %1178 = vmatprep.subr.bf16.mxu0 %v1115
    %1179 = vmatpush1.bf16.msra.mxu0 %v1114
    %1180 = vmatprep.subr.bf16.mxu0 %v1117
    %1181 = vmatpush1.bf16.msra.mxu0 %v1116
    %1182 = vmatprep.subr.bf16.mxu0 %v1119
    %1183 = vmatpush1.bf16.msra.mxu0 %v1118
    %1184 = vmatprep.subr.bf16.mxu0 %v1121
    %1185 = vmatpush1.bf16.msra.mxu0 %v1120
    %1186 = vmatprep.mubr.bf16.mxu0 %v947
    %1187 = vmatmul.mubr.bf16.gmra.mrb[0].mxu0 %v946
    %v1188 = vpop.f32.mrb[0].mxu0
    %v1189 = vadd.f32 %v987, %v1188
    %v1190 = vpop.f32.mrb[0].mxu0
    %v1191 = vadd.f32 %v991, %v1190
    %v1192 = vpop.f32.mrb[0].mxu0
    %v1193 = vpop.f32.mrb[0].mxu0
    %1194 = vdwg.mxu0
    %v1195 = vmax.f32 %v1189, 0.0
    %v1196 = vmax.f32 %v1191, 0.0
    %v1197 = vpack.c.bf16 %v1195, %v1195
    %v1198 = vpack.c.bf16 %v1196, %v1196
    %s1199 = scalar_lea.vmem [#allocation2], 1024
    %v1200 = vld [vmem:[%s1199] sm:$0xff]
    %v1201 = vld [vmem:[%s1199 + $0x8] sm:$0xff]
    %v1202 = vld [vmem:[%s1199 + $0x10] sm:$0xff]
    %v1203 = vld [vmem:[%s1199 + $0x18] sm:$0xff]
    %v1204 = vld [vmem:[%s1199 + $0x20] sm:$0xff]
    %v1205 = vld [vmem:[%s1199 + $0x28] sm:$0xff]
    %v1206 = vld [vmem:[%s1199 + $0x30] sm:$0xff]
    %v1207 = vld [vmem:[%s1199 + $0x38] sm:$0xff]
    %v1208 = vld [vmem:[%s1199 + $0x40] sm:$0xff]
    %v1209 = vld [vmem:[%s1199 + $0x48] sm:$0xff]
    %v1210 = vld [vmem:[%s1199 + $0x50] sm:$0xff]
    %v1211 = vld [vmem:[%s1199 + $0x58] sm:$0xff]
    %v1212 = vld [vmem:[%s1199 + $0x60] sm:$0xff]
    %v1213 = vld [vmem:[%s1199 + $0x68] sm:$0xff]
    %v1214 = vld [vmem:[%s1199 + $0x70] sm:$0xff]
    %v1215 = vld [vmem:[%s1199 + $0x78] sm:$0xff]
    %v1216 = vld [vmem:[%s1199 + $0x80] sm:$0xff]
    %v1217 = vld [vmem:[%s1199 + $0x88] sm:$0xff]
    %v1218 = vld [vmem:[%s1199 + $0x90] sm:$0xff]
    %v1219 = vld [vmem:[%s1199 + $0x98] sm:$0xff]
    %v1220 = vld [vmem:[%s1199 + $0xa0] sm:$0xff]
    %v1221 = vld [vmem:[%s1199 + $0xa8] sm:$0xff]
    %v1222 = vld [vmem:[%s1199 + $0xb0] sm:$0xff]
    %v1223 = vld [vmem:[%s1199 + $0xb8] sm:$0xff]
    %v1224 = vld [vmem:[%s1199 + $0xc0] sm:$0xff]
    %v1225 = vld [vmem:[%s1199 + $0xc8] sm:$0xff]
    %v1226 = vld [vmem:[%s1199 + $0xd0] sm:$0xff]
    %v1227 = vld [vmem:[%s1199 + $0xd8] sm:$0xff]
    %v1228 = vld [vmem:[%s1199 + $0xe0] sm:$0xff]
    %v1229 = vld [vmem:[%s1199 + $0xe8] sm:$0xff]
    %v1230 = vld [vmem:[%s1199 + $0xf0] sm:$0xff]
    %v1231 = vld [vmem:[%s1199 + $0xf8] sm:$0xff]
    %s1232 = scalar_lea.vmem %s4, 8
    %v1233 = vld [vmem:[%s1232] sm:$0x3]
    %v1235 = vlaneseq
    %v1236 = vshrl.u32 %v1235, 7
    %v1237 = vsub.s32 0, %v1236
    %v1238 = vrot.slane %v1233, %v1237
    %v1239 = vlaneseq
    %v1240 = vshrl.u32 %v1239, 7
    %v1241 = vsub.s32 1, %v1240
    %v1242 = vrot.slane %v1233, %v1241
    %v1277 = vunpack.c.l.b16 %v1200
    %v1278 = vunpack.c.h.b16 %v1200
    %v1279 = vunpack.c.l.b16 %v1201
    %v1280 = vunpack.c.h.b16 %v1201
    %v1281 = vunpack.c.l.b16 %v1202
    %v1282 = vunpack.c.h.b16 %v1202
    %v1283 = vunpack.c.l.b16 %v1203
    %v1284 = vunpack.c.h.b16 %v1203
    %v1285 = vunpack.c.l.b16 %v1204
    %v1286 = vunpack.c.h.b16 %v1204
    %v1287 = vunpack.c.l.b16 %v1205
    %v1288 = vunpack.c.h.b16 %v1205
    %v1289 = vunpack.c.l.b16 %v1206
    %v1290 = vunpack.c.h.b16 %v1206
    %v1291 = vunpack.c.l.b16 %v1207
    %v1292 = vunpack.c.h.b16 %v1207
    %v1293 = vunpack.c.l.b16 %v1208
    %v1294 = vunpack.c.h.b16 %v1208
    %v1295 = vunpack.c.l.b16 %v1209
    %v1296 = vunpack.c.h.b16 %v1209
    %v1297 = vunpack.c.l.b16 %v1210
    %v1298 = vunpack.c.h.b16 %v1210
    %v1299 = vunpack.c.l.b16 %v1211
    %v1300 = vunpack.c.h.b16 %v1211
    %v1301 = vunpack.c.l.b16 %v1212
    %v1302 = vunpack.c.h.b16 %v1212
    %v1303 = vunpack.c.l.b16 %v1213
    %v1304 = vunpack.c.h.b16 %v1213
    %v1305 = vunpack.c.l.b16 %v1214
    %v1306 = vunpack.c.h.b16 %v1214
    %v1307 = vunpack.c.l.b16 %v1215
    %v1308 = vunpack.c.h.b16 %v1215
    %v1309 = vunpack.c.l.b16 %v1216
    %v1310 = vunpack.c.h.b16 %v1216
    %v1311 = vunpack.c.l.b16 %v1217
    %v1312 = vunpack.c.h.b16 %v1217
    %v1313 = vunpack.c.l.b16 %v1218
    %v1314 = vunpack.c.h.b16 %v1218
    %v1315 = vunpack.c.l.b16 %v1219
    %v1316 = vunpack.c.h.b16 %v1219
    %v1317 = vunpack.c.l.b16 %v1220
    %v1318 = vunpack.c.h.b16 %v1220
    %v1319 = vunpack.c.l.b16 %v1221
    %v1320 = vunpack.c.h.b16 %v1221
    %v1321 = vunpack.c.l.b16 %v1222
    %v1322 = vunpack.c.h.b16 %v1222
    %v1323 = vunpack.c.l.b16 %v1223
    %v1324 = vunpack.c.h.b16 %v1223
    %v1325 = vunpack.c.l.b16 %v1224
    %v1326 = vunpack.c.h.b16 %v1224
    %v1327 = vunpack.c.l.b16 %v1225
    %v1328 = vunpack.c.h.b16 %v1225
    %v1329 = vunpack.c.l.b16 %v1226
    %v1330 = vunpack.c.h.b16 %v1226
    %v1331 = vunpack.c.l.b16 %v1227
    %v1332 = vunpack.c.h.b16 %v1227
    %v1333 = vunpack.c.l.b16 %v1228
    %v1334 = vunpack.c.h.b16 %v1228
    %v1335 = vunpack.c.l.b16 %v1229
    %v1336 = vunpack.c.h.b16 %v1229
    %v1337 = vunpack.c.l.b16 %v1230
    %v1338 = vunpack.c.h.b16 %v1230
    %v1339 = vunpack.c.l.b16 %v1231
    %v1340 = vunpack.c.h.b16 %v1231
    %v1341 = vpack.c.b16 %v1279, %v1277
    %v1342 = vpack.c.b16 %v1280, %v1278
    %v1343 = vpack.c.b16 %v1283, %v1281
    %v1344 = vpack.c.b16 %v1284, %v1282
    %v1345 = vpack.c.b16 %v1287, %v1285
    %v1346 = vpack.c.b16 %v1288, %v1286
    %v1347 = vpack.c.b16 %v1291, %v1289
    %v1348 = vpack.c.b16 %v1292, %v1290
    %v1349 = vpack.c.b16 %v1295, %v1293
    %v1350 = vpack.c.b16 %v1296, %v1294
    %v1351 = vpack.c.b16 %v1299, %v1297
    %v1352 = vpack.c.b16 %v1300, %v1298
    %v1353 = vpack.c.b16 %v1303, %v1301
    %v1354 = vpack.c.b16 %v1304, %v1302
    %v1355 = vpack.c.b16 %v1307, %v1305
    %v1356 = vpack.c.b16 %v1308, %v1306
    %v1357 = vpack.c.b16 %v1311, %v1309
    %v1358 = vpack.c.b16 %v1312, %v1310
    %v1359 = vpack.c.b16 %v1315, %v1313
    %v1360 = vpack.c.b16 %v1316, %v1314
    %v1361 = vpack.c.b16 %v1319, %v1317
    %v1362 = vpack.c.b16 %v1320, %v1318
    %v1363 = vpack.c.b16 %v1323, %v1321
    %v1364 = vpack.c.b16 %v1324, %v1322
    %v1365 = vpack.c.b16 %v1327, %v1325
    %v1366 = vpack.c.b16 %v1328, %v1326
    %v1367 = vpack.c.b16 %v1331, %v1329
    %v1368 = vpack.c.b16 %v1332, %v1330
    %v1369 = vpack.c.b16 %v1335, %v1333
    %v1370 = vpack.c.b16 %v1336, %v1334
    %v1371 = vpack.c.b16 %v1339, %v1337
    %v1372 = vpack.c.b16 %v1340, %v1338
    %1405 = vmatprep.subr.bf16.mxu0 %v1342
    %1406 = vmatpush1.bf16.msra.mxu0 %v1341
    %1407 = vmatprep.subr.bf16.mxu0 %v1344
    %1408 = vmatpush1.bf16.msra.mxu0 %v1343
    %1409 = vmatprep.subr.bf16.mxu0 %v1346
    %1410 = vmatpush1.bf16.msra.mxu0 %v1345
    %1411 = vmatprep.subr.bf16.mxu0 %v1348
    %1412 = vmatpush1.bf16.msra.mxu0 %v1347
    %1413 = vmatprep.subr.bf16.mxu0 %v1350
    %1414 = vmatpush1.bf16.msra.mxu0 %v1349
    %1415 = vmatprep.subr.bf16.mxu0 %v1352
    %1416 = vmatpush1.bf16.msra.mxu0 %v1351
    %1417 = vmatprep.subr.bf16.mxu0 %v1354
    %1418 = vmatpush1.bf16.msra.mxu0 %v1353
    %1419 = vmatprep.subr.bf16.mxu0 %v1356
    %1420 = vmatpush1.bf16.msra.mxu0 %v1355
    %1421 = vmatprep.subr.bf16.mxu0 %v1358
    %1422 = vmatpush1.bf16.msra.mxu0 %v1357
    %1423 = vmatprep.subr.bf16.mxu0 %v1360
    %1424 = vmatpush1.bf16.msra.mxu0 %v1359
    %1425 = vmatprep.subr.bf16.mxu0 %v1362
    %1426 = vmatpush1.bf16.msra.mxu0 %v1361
    %1427 = vmatprep.subr.bf16.mxu0 %v1364
    %1428 = vmatpush1.bf16.msra.mxu0 %v1363
    %1429 = vmatprep.subr.bf16.mxu0 %v1366
    %1430 = vmatpush1.bf16.msra.mxu0 %v1365
    %1431 = vmatprep.subr.bf16.mxu0 %v1368
    %1432 = vmatpush1.bf16.msra.mxu0 %v1367
    %1433 = vmatprep.subr.bf16.mxu0 %v1370
    %1434 = vmatpush1.bf16.msra.mxu0 %v1369
    %1435 = vmatprep.subr.bf16.mxu0 %v1372
    %1436 = vmatpush1.bf16.msra.mxu0 %v1371
    %1437 = vmatprep.mubr.bf16.mxu0 %v1198
    %1438 = vmatmul.mubr.bf16.gmra.mrb[0].mxu0 %v1197
    %v1439 = vpop.f32.mrb[0].mxu0
    %v1440 = vadd.f32 %v1238, %v1439
    %v1441 = vpop.f32.mrb[0].mxu0
    %v1442 = vadd.f32 %v1242, %v1441
    %v1443 = vpop.f32.mrb[0].mxu0
    %v1444 = vpop.f32.mrb[0].mxu0
    %1445 = vdwg.mxu0
    %v1446 = vmax.f32 %v1440, 0.0
    %v1447 = vmax.f32 %v1442, 0.0
    %v1448 = vld [vmem:[%s5] sm:$0xff]
    %v1449 = vld [vmem:[%s5 + $0x8] sm:$0xff]
    %v1450 = vld [vmem:[%s5 + $0x10] sm:$0xff]
    %v1451 = vld [vmem:[%s5 + $0x18] sm:$0xff]
    %v1452 = vld [vmem:[%s5 + $0x20] sm:$0xff]
    %v1453 = vld [vmem:[%s5 + $0x28] sm:$0xff]
    %v1454 = vld [vmem:[%s5 + $0x30] sm:$0xff]
    %v1455 = vld [vmem:[%s5 + $0x38] sm:$0xff]
    %v1456 = vld [vmem:[%s5 + $0x40] sm:$0xff]
    %v1457 = vld [vmem:[%s5 + $0x48] sm:$0xff]
    %v1458 = vld [vmem:[%s5 + $0x50] sm:$0xff]
    %v1459 = vld [vmem:[%s5 + $0x58] sm:$0xff]
    %v1460 = vld [vmem:[%s5 + $0x60] sm:$0xff]
    %v1461 = vld [vmem:[%s5 + $0x68] sm:$0xff]
    %v1462 = vld [vmem:[%s5 + $0x70] sm:$0xff]
    %v1463 = vld [vmem:[%s5 + $0x78] sm:$0xff]
    %v1464 = vld [vmem:[%s5 + $0x80] sm:$0xff]
    %v1465 = vld [vmem:[%s5 + $0x88] sm:$0xff]
    %v1466 = vld [vmem:[%s5 + $0x90] sm:$0xff]
    %v1467 = vld [vmem:[%s5 + $0x98] sm:$0xff]
    %v1468 = vld [vmem:[%s5 + $0xa0] sm:$0xff]
    %v1469 = vld [vmem:[%s5 + $0xa8] sm:$0xff]
    %v1470 = vld [vmem:[%s5 + $0xb0] sm:$0xff]
    %v1471 = vld [vmem:[%s5 + $0xb8] sm:$0xff]
    %v1472 = vld [vmem:[%s5 + $0xc0] sm:$0xff]
    %v1473 = vld [vmem:[%s5 + $0xc8] sm:$0xff]
    %v1474 = vld [vmem:[%s5 + $0xd0] sm:$0xff]
    %v1475 = vld [vmem:[%s5 + $0xd8] sm:$0xff]
    %v1476 = vld [vmem:[%s5 + $0xe0] sm:$0xff]
    %v1477 = vld [vmem:[%s5 + $0xe8] sm:$0xff]
    %v1478 = vld [vmem:[%s5 + $0xf0] sm:$0xff]
    %v1479 = vld [vmem:[%s5 + $0xf8] sm:$0xff]
    %v1480 = vld [vmem:[%s6] sm:$0x1]
    %v1482 = vlaneseq
    %v1483 = vshrl.u32 %v1482, 7
    %v1484 = vsub.s32 0, %v1483
    %v1485 = vrot.slane %v1480, %v1484
    %1487 = vmatprep.subr.mxu0 0.0
    %1488 = vmatpush1.msra.mxu0 %v1448
    %1489 = vmatprep.subr.mxu0 0.0
    %1490 = vmatpush1.msra.mxu0 %v1449
    %1491 = vmatprep.subr.mxu0 0.0
    %1492 = vmatpush1.msra.mxu0 %v1450
    %1493 = vmatprep.subr.mxu0 0.0
    %1494 = vmatpush1.msra.mxu0 %v1451
    %1495 = vmatprep.subr.mxu0 0.0
    %1496 = vmatpush1.msra.mxu0 %v1452
    %1497 = vmatprep.subr.mxu0 0.0
    %1498 = vmatpush1.msra.mxu0 %v1453
    %1499 = vmatprep.subr.mxu0 0.0
    %1500 = vmatpush1.msra.mxu0 %v1454
    %1501 = vmatprep.subr.mxu0 0.0
    %1502 = vmatpush1.msra.mxu0 %v1455
    %1503 = vmatprep.subr.mxu0 0.0
    %1504 = vmatpush1.msra.mxu0 %v1456
    %1505 = vmatprep.subr.mxu0 0.0
    %1506 = vmatpush1.msra.mxu0 %v1457
    %1507 = vmatprep.subr.mxu0 0.0
    %1508 = vmatpush1.msra.mxu0 %v1458
    %1509 = vmatprep.subr.mxu0 0.0
    %1510 = vmatpush1.msra.mxu0 %v1459
    %1511 = vmatprep.subr.mxu0 0.0
    %1512 = vmatpush1.msra.mxu0 %v1460
    %1513 = vmatprep.subr.mxu0 0.0
    %1514 = vmatpush1.msra.mxu0 %v1461
    %1515 = vmatprep.subr.mxu0 0.0
    %1516 = vmatpush1.msra.mxu0 %v1462
    %1517 = vmatprep.subr.mxu0 0.0
    %1518 = vmatpush1.msra.mxu0 %v1463
    %1519 = vmatprep.subr.mxu0 0.0
    %1520 = vmatpush1.msra.mxu0 %v1464
    %1521 = vmatprep.subr.mxu0 0.0
    %1522 = vmatpush1.msra.mxu0 %v1465
    %1523 = vmatprep.subr.mxu0 0.0
    %1524 = vmatpush1.msra.mxu0 %v1466
    %1525 = vmatprep.subr.mxu0 0.0
    %1526 = vmatpush1.msra.mxu0 %v1467
    %1527 = vmatprep.subr.mxu0 0.0
    %1528 = vmatpush1.msra.mxu0 %v1468
    %1529 = vmatprep.subr.mxu0 0.0
    %1530 = vmatpush1.msra.mxu0 %v1469
    %1531 = vmatprep.subr.mxu0 0.0
    %1532 = vmatpush1.msra.mxu0 %v1470
    %1533 = vmatprep.subr.mxu0 0.0
    %1534 = vmatpush1.msra.mxu0 %v1471
    %1535 = vmatprep.subr.mxu0 0.0
    %1536 = vmatpush1.msra.mxu0 %v1472
    %1537 = vmatprep.subr.mxu0 0.0
    %1538 = vmatpush1.msra.mxu0 %v1473
    %1539 = vmatprep.subr.mxu0 0.0
    %1540 = vmatpush1.msra.mxu0 %v1474
    %1541 = vmatprep.subr.mxu0 0.0
    %1542 = vmatpush1.msra.mxu0 %v1475
    %1543 = vmatprep.subr.mxu0 0.0
    %1544 = vmatpush1.msra.mxu0 %v1476
    %1545 = vmatprep.subr.mxu0 0.0
    %1546 = vmatpush1.msra.mxu0 %v1477
    %1547 = vmatprep.subr.mxu0 0.0
    %1548 = vmatpush1.msra.mxu0 %v1478
    %1549 = vmatprep.subr.mxu0 0.0
    %1550 = vmatpush1.msra.mxu0 %v1479
    %1551 = vmatprep.mubr.f32.mxu0 %v1447
    %1552 = vmatmul.mubr.f32.gmra.mrb[0].mxu0 %v1446
    %v1553 = vpop.f32.mrb[0].mxu0
    %v1554 = vadd.f32 %v1485, %v1553
    %v1555 = vpop.f32.mrb[0].mxu0
    %1556 = vdwg.mxu0
    %vm1557 = vcmask 523264
    %1558 = vst.msk [vmem:[#allocation5] sm:$0xff] %vm1557, %v1554
    // Predicated region
    $region34: #{tpu_custom_call.1} parent=1 // pred_check
      _
    $region35: #{tpu_custom_call.1} parent=1 // pred_check_branch
      %1560 = sbr.rel (0) target = $region37
    $region36: #{tpu_custom_call.1} parent=1 // pred_region
      %s1562 = ssub.s32 128, 128
      %1563 = vsyncadd [#allocation4], %s1562
      %s1565 = sshll.u32 [#allocation5], 4
      %s1566 = int_to_ptr.vmem [resolvable:$true] %s1565
      %1568 = dma.vmem_to_hbm [thread:$0]  %s1566, 128, %s7, [#allocation4]
    $region37: #{tpu_custom_call.1} parent=1 // pred_fallthru
      _
    // Predicated region
    $region38: #{tpu_custom_call.1} parent=1 // pred_check
      _
    $region39: #{tpu_custom_call.1} parent=1 // pred_check_branch
      %1570 = sbr.rel (0) target = $region41
    $region40: #{tpu_custom_call.1} parent=1 // pred_region
      %1571 = dma.done [#allocation4], 128
    $region41: #{tpu_custom_call.1} parent=1 // pred_fallthru
      _
    %1572 = vsyncpa [#allocation3], 1
    %1573 = vsyncpa [#allocation4], 1

</llo_original>
